<compile_context>
chip_gen: v6e
topology: v6e:2x2x1
jax: 0.10.0
libtpu: 0.0.40
codegen_flags: <defaults>
</compile_context>

<pallas_src>
import functools

import jax
import jax.numpy as jnp
from jax.experimental import pallas as pl
from jax.experimental.pallas import tpu as pltpu


def _round_up(x, m):
    return (x + m - 1) // m * m


def _dilconv_kernel(x_ref, scale_ref, shift_ref, dw_ref, pw_ref, o_ref, slots_ref,
                    *, K, dilation, padding, out_h, out_w, row_chunk):
    """One batch item: BN+ReLU -> dilated depthwise conv -> 1x1 pointwise (bf16 MXU)."""
    H = x_ref.shape[1]
    W = x_ref.shape[2]

    # ---- BatchNorm (inference, folded to per-channel scale/shift) + ReLU (VPU) ---
    a = jnp.maximum(x_ref[0] * scale_ref[...] + shift_ref[...], 0.0)   # (H, W, C_in)

    # ---- In-kernel conv zero-padding ---------------------------------------------
    # slots_ref[kw, h, w, :] == zero-padded activation at (h, w + kw*dilation), so
    # every tap read below is a sublane-aligned ref load (W slice starting at 0),
    # replacing the per-tap unaligned value-slice copies flagged by the review.
    # Scratch persists across grid steps (and is per-core under "parallel"
    # semantics), so it is re-zeroed every step; it is tiny (K*Hp*Ws*C_in floats).
    slots_ref[...] = jnp.zeros_like(slots_ref)
    for kw in range(K):
        off = padding - kw * dilation        # W offset of the image inside slot kw
        src_lo = max(0, -off)
        dst_lo = max(0, off)
        length = W - src_lo
        if length > 0:
            src = a if src_lo == 0 else a[:, src_lo:src_lo + length, :]
            slots_ref[kw, padding:padding + H, dst_lo:dst_lo + length, :] = src

    # ---- Weights: load once, outside the unrolled tap loops ----------------------
    dw = dw_ref[...]            # (K*K, C_in) f32 depthwise taps
    pw = pw_ref[...]            # (C_in, C_out) bf16 pointwise weights
    C_in = dw.shape[1]
    C_out = pw.shape[1]

    # ---- Dilated depthwise conv (VPU FMAs, chunked over output rows), then -------
    # ---- the 1x1 pointwise conv as a single-pass bf16 MXU matmul per chunk -------
    for r0 in range(0, out_h, row_chunk):
        rows = min(row_chunk, out_h - r0)
        acc = jnp.zeros((rows, out_w, C_in), jnp.float32)
        for kh in range(K):
            h0 = r0 + kh * dilation
            for kw in range(K):
                tap = slots_ref[kw, h0:h0 + rows, 0:out_w, :]    # aligned load
                acc = acc + tap * dw[kh * K + kw]
        # Pure relabel when out_w % 8 == 0 (true for the demo shapes).
        flat = acc.reshape(rows * out_w, C_in).astype(jnp.bfloat16)
        y = jnp.dot(flat, pw, preferred_element_type=jnp.float32)
        o_ref[0, r0:r0 + rows, :, :] = (
            y.reshape(rows, out_w, C_out).astype(o_ref.dtype))


def dil_conv(x, gamma, beta, running_mean, running_var, dw_weight, pw_weight,
             *, stride=1, padding=2, dilation=2, eps=1e-5, row_chunk=8):
    """DilConv forward: BN -> ReLU -> dilated depthwise conv -> 1x1 pointwise conv.

    x: (N, C_in, H, W) NCHW (PyTorch layout).  Returns (N, C_out, H_out, W_out).
    """
    if stride != 1:
        # TODO(synk): stride > 1 needs strided output indexing (output BlockSpec /
        # index arithmetic); the old strided value-slice path was untested/unsafe.
        raise NotImplementedError("dil_conv Pallas kernel currently supports stride=1 only")

    N, C_in, H, W = x.shape
    C_out = pw_weight.shape[0]
    K = dw_weight.shape[-1]

    out_h = H + 2 * padding - dilation * (K - 1)
    out_w = W + 2 * padding - dilation * (K - 1)
    assert out_h > 0 and out_w > 0

    Hp = H + 2 * padding                           # padded rows actually touched
    Ws = _round_up(max(padding + W, out_w), 8)     # slot width, sublane-aligned

    # BatchNorm (inference) folded into per-channel scale/shift applied before ReLU.
    scale_c = (gamma / jnp.sqrt(running_var + eps)).astype(jnp.float32)
    shift_c = (beta - running_mean * scale_c).astype(jnp.float32)
    scale = scale_c.reshape(1, C_in)
    shift = shift_c.reshape(1, C_in)

    # Depthwise weights (C_in, 1, K, K) -> (K*K, C_in); pointwise (C_out, C_in, 1, 1)
    # -> (C_in, C_out) stored in bf16 for the single-pass MXU matmul (f32 accum).
    dw2 = dw_weight.reshape(C_in, K * K).T.astype(jnp.float32)
    pw2 = pw_weight[:, :, 0, 0].T.astype(jnp.bfloat16)

    # NCHW -> NHWC (channels on lanes).  No channel or spatial zero-padding in HBM.
    # TODO(synk): in a full network keep activations NHWC end-to-end so this
    # transpose (and the one on the way out) happens once per network, not per op.
    x_nhwc = jnp.transpose(x, (0, 2, 3, 1)).astype(jnp.float32)

    kernel = functools.partial(
        _dilconv_kernel, K=K, dilation=dilation, padding=padding,
        out_h=out_h, out_w=out_w, row_chunk=min(row_chunk, out_h))

    # Per-grid-step VMEM (x block + output block + slot scratch) is ~0.1 MiB at the
    # demo shapes -- far below every generation's scoped-VMEM default (16 MiB v5e,
    # 32 MiB v6e/v7x), so no explicit vmem_limit_bytes is needed here.
    # TODO(synk): for large H/W add a second, parallel grid axis over output-row
    # tiles (haloed x blocks) to bound VMEM on v7x (64 MiB physical) and to give
    # both of its TensorCores more work than min(N, 2) grid steps.
    out_nhwc = pl.pallas_call(
        kernel,
        out_shape=jax.ShapeDtypeStruct((N, out_h, out_w, C_out), jnp.float32),
        grid_spec=pltpu.PrefetchScalarGridSpec(
            num_scalar_prefetch=0,
            grid=(N,),
            in_specs=[
                pl.BlockSpec((1, H, W, C_in), lambda n: (n, 0, 0, 0)),   # x (unpadded)
                pl.BlockSpec((1, C_in), lambda n: (0, 0)),               # BN scale
                pl.BlockSpec((1, C_in), lambda n: (0, 0)),               # BN shift
                pl.BlockSpec((K * K, C_in), lambda n: (0, 0)),           # depthwise w
                pl.BlockSpec((C_in, C_out), lambda n: (0, 0)),           # pointwise w
            ],
            out_specs=pl.BlockSpec((1, out_h, out_w, C_out),
                                   lambda n: (n, 0, 0, 0)),
            scratch_shapes=[pltpu.VMEM((K, Hp, Ws, C_in), jnp.float32)],
        ),
        compiler_params=pltpu.CompilerParams(
            dimension_semantics=("parallel",)),
    )(x_nhwc, scale, shift, dw2, pw2)

    # Back to NCHW for the PyTorch-facing contract.
    return jnp.transpose(out_nhwc, (0, 3, 1, 2))


def dilconv_reference(x, gamma, beta, mean, var, dw_w, pw_w,
                      *, stride, padding, dilation, eps=1e-5, pointwise_bf16=False):
    """Pure-JAX reference: BN(inference) -> ReLU -> dilated depthwise -> pointwise."""
    C_in = x.shape[1]
    scale = gamma / jnp.sqrt(var + eps)
    shift = beta - mean * scale
    a = x * scale[None, :, None, None] + shift[None, :, None, None]
    a = jnp.maximum(a, 0.0)
    dimnums = ('NCHW', 'OIHW', 'NCHW')
    dw = jax.lax.conv_general_dilated(
        a, dw_w, window_strides=(stride, stride),
        padding=[(padding, padding), (padding, padding)],
        rhs_dilation=(dilation, dilation),
        dimension_numbers=dimnums, feature_group_count=C_in,
        precision=jax.lax.Precision.HIGHEST)
    if pointwise_bf16:
        # Mimic the kernel's bf16 MXU matmul (bf16 operands, f32 accumulation).
        dw = dw.astype(jnp.bfloat16).astype(jnp.float32)
        pw_w = pw_w.astype(jnp.bfloat16).astype(jnp.float32)
    pw = jax.lax.conv_general_dilated(
        dw, pw_w, window_strides=(1, 1), padding=[(0, 0), (0, 0)],
        dimension_numbers=dimnums,
        precision=jax.lax.Precision.HIGHEST)
    return pw


if __name__ == "__main__":
    key = jax.random.PRNGKey(0)
    ks = jax.random.split(key, 7)

    N, C_in, H, W = 2, 4, 16, 16
    C_out, K, stride, padding, dilation = 8, 3, 1, 2, 2   # dil_conv_3x3-style

    x = jax.random.normal(ks[0], (N, C_in, H, W), jnp.float32)
    gamma = 1.0 + 0.1 * jax.random.normal(ks[1], (C_in,), jnp.float32)
    beta = 0.1 * jax.random.normal(ks[2], (C_in,), jnp.float32)
    r_mean = 0.1 * jax.random.normal(ks[3], (C_in,), jnp.float32)
    r_var = jax.random.uniform(ks[4], (C_in,), jnp.float32, 0.5, 1.5)
    dw_w = 0.3 * jax.random.normal(ks[5], (C_in, 1, K, K), jnp.float32)
    pw_w = 0.3 * jax.random.normal(ks[6], (C_out, C_in, 1, 1), jnp.float32)

    y = dil_conv(x, gamma, beta, r_mean, r_var, dw_w, pw_w,
                 stride=stride, padding=padding, dilation=dilation)
    jax.block_until_ready(y)

    y_ref = dilconv_reference(x, gamma, beta, r_mean, r_var, dw_w, pw_w,
                              stride=stride, padding=padding, dilation=dilation)
    y_ref_bf16 = dilconv_reference(x, gamma, beta, r_mean, r_var, dw_w, pw_w,
                                   stride=stride, padding=padding, dilation=dilation,
                                   pointwise_bf16=True)

    assert y.shape == y_ref.shape, (y.shape, y_ref.shape)
    # Tight check vs a reference whose pointwise matmul inputs are bf16-quantised
    # exactly like the kernel's single-pass MXU matmul.
    err_bf16 = float(jnp.max(jnp.abs(y - y_ref_bf16)))
    assert jnp.allclose(y, y_ref_bf16, rtol=2e-2, atol=2e-2), err_bf16
    # Looser check vs the pure-f32 reference (bounds the bf16 approximation error).
    err_f32 = float(jnp.max(jnp.abs(y - y_ref)))
    assert jnp.allclose(y, y_ref, rtol=5e-2, atol=5e-2), err_f32
    print("KERNEL_OK")
</pallas_src>

<mosaic_0001>
module attributes {stable_mosaic.version = 11 : i64} {
  func.func @_dilconv_kernel(%arg0: i32, %arg1: memref<1x16x16x4xf32, #tpu.memory_space<vmem>>, %arg2: memref<1x4xf32, #tpu.memory_space<vmem>>, %arg3: memref<1x4xf32, #tpu.memory_space<vmem>>, %arg4: memref<9x4xf32, #tpu.memory_space<vmem>>, %arg5: memref<4x8xbf16, #tpu.memory_space<vmem>>, %arg6: memref<1x16x16x8xf32, #tpu.memory_space<vmem>>, %arg7: memref<3x20x24x4xf32, #tpu.memory_space<vmem>>) attributes {dimension_semantics = [#tpu.dimension_semantics<parallel>], iteration_bounds = array<i64: 2>, scalar_prefetch = 0 : i64, scratch_operands = 1 : i64, tpu.core_type = #tpu.core_type<tc>, window_params = [{transform_indices = @transform_0, window_bounds = array<i64: 1, 16, 16, 4>}, {pipeline_mode = #tpu.pipeline_mode<synchronous>, transform_indices = @transform_1, window_bounds = array<i64: 1, 4>}, {pipeline_mode = #tpu.pipeline_mode<synchronous>, transform_indices = @transform_2, window_bounds = array<i64: 1, 4>}, {pipeline_mode = #tpu.pipeline_mode<synchronous>, transform_indices = @transform_3, window_bounds = array<i64: 9, 4>}, {pipeline_mode = #tpu.pipeline_mode<synchronous>, transform_indices = @transform_4, window_bounds = array<i64: 4, 8>}, {transform_indices = @transform_5, window_bounds = array<i64: 1, 16, 16, 8>}]} {
    %c0 = arith.constant 0 : index
    %c0_0 = arith.constant 0 : index
    %c0_1 = arith.constant 0 : index
    %c0_2 = arith.constant 0 : index
    %0 = vector.load %arg1[%c0, %c0_0, %c0_1, %c0_2] : memref<1x16x16x4xf32, #tpu.memory_space<vmem>>, vector<1x16x16x4xf32>
    %1 = vector.shape_cast %0 : vector<1x16x16x4xf32> to vector<16x16x4xf32>
    %c0_3 = arith.constant 0 : index
    %c0_4 = arith.constant 0 : index
    %2 = vector.load %arg2[%c0_3, %c0_4] : memref<1x4xf32, #tpu.memory_space<vmem>>, vector<1x4xf32>
    %3 = vector.shape_cast %2 : vector<1x4xf32> to vector<1x1x4xf32>
    %4 = vector.broadcast %3 : vector<1x1x4xf32> to vector<16x16x4xf32>
    %5 = arith.mulf %1, %4 : vector<16x16x4xf32>
    %c0_5 = arith.constant 0 : index
    %c0_6 = arith.constant 0 : index
    %6 = vector.load %arg3[%c0_5, %c0_6] : memref<1x4xf32, #tpu.memory_space<vmem>>, vector<1x4xf32>
    %7 = vector.shape_cast %6 : vector<1x4xf32> to vector<1x1x4xf32>
    %8 = vector.broadcast %7 : vector<1x1x4xf32> to vector<16x16x4xf32>
    %9 = arith.addf %5, %8 : vector<16x16x4xf32>
    %cst = arith.constant 0.000000e+00 : f32
    %10 = vector.broadcast %cst : f32 to vector<16x16x4xf32>
    %11 = arith.maximumf %9, %10 : vector<16x16x4xf32>
    %cst_7 = arith.constant 0.000000e+00 : f32
    %12 = vector.broadcast %cst_7 : f32 to vector<3x20x24x4xf32>
    %c0_8 = arith.constant 0 : index
    %c0_9 = arith.constant 0 : index
    %c0_10 = arith.constant 0 : index
    %c0_11 = arith.constant 0 : index
    %13 = vector.load %arg7[%c0_8, %c0_9, %c0_10, %c0_11] : memref<3x20x24x4xf32, #tpu.memory_space<vmem>>, vector<3x20x24x4xf32>
    tpu.vector_store %arg7[%c0_8, %c0_9, %c0_10, %c0_11], %12 {strides = array<i32>} : memref<3x20x24x4xf32, #tpu.memory_space<vmem>>, vector<3x20x24x4xf32>,
    %c0_12 = arith.constant 0 : index
    %c2 = arith.constant 2 : index
    %c2_13 = arith.constant 2 : index
    %c0_14 = arith.constant 0 : index
    %14 = vector.load %arg7[%c0_12, %c2, %c2_13, %c0_14] : memref<3x20x24x4xf32, #tpu.memory_space<vmem>>, vector<1x16x16x4xf32>
    %15 = vector.shape_cast %14 : vector<1x16x16x4xf32> to vector<16x16x4xf32>
    %16 = vector.shape_cast %11 : vector<16x16x4xf32> to vector<1x16x16x4xf32>
    tpu.vector_store %arg7[%c0_12, %c2, %c2_13, %c0_14], %16 {strides = array<i32>} : memref<3x20x24x4xf32, #tpu.memory_space<vmem>>, vector<1x16x16x4xf32>,
    %c1 = arith.constant 1 : index
    %c2_15 = arith.constant 2 : index
    %c0_16 = arith.constant 0 : index
    %c0_17 = arith.constant 0 : index
    %17 = vector.load %arg7[%c1, %c2_15, %c0_16, %c0_17] : memref<3x20x24x4xf32, #tpu.memory_space<vmem>>, vector<1x16x16x4xf32>
    %18 = vector.shape_cast %17 : vector<1x16x16x4xf32> to vector<16x16x4xf32>
    %19 = vector.shape_cast %11 : vector<16x16x4xf32> to vector<1x16x16x4xf32>
    tpu.vector_store %arg7[%c1, %c2_15, %c0_16, %c0_17], %19 {strides = array<i32>} : memref<3x20x24x4xf32, #tpu.memory_space<vmem>>, vector<1x16x16x4xf32>,
    %20 = vector.extract_strided_slice %11 {offsets = [0, 2, 0], sizes = [16, 14, 4], strides = [1, 1, 1]} : vector<16x16x4xf32> to vector<16x14x4xf32>
    %c2_18 = arith.constant 2 : index
    %c2_19 = arith.constant 2 : index
    %c0_20 = arith.constant 0 : index
    %c0_21 = arith.constant 0 : index
    %21 = vector.load %arg7[%c2_18, %c2_19, %c0_20, %c0_21] : memref<3x20x24x4xf32, #tpu.memory_space<vmem>>, vector<1x16x14x4xf32>
    %22 = vector.shape_cast %21 : vector<1x16x14x4xf32> to vector<16x14x4xf32>
    %23 = vector.shape_cast %20 : vector<16x14x4xf32> to vector<1x16x14x4xf32>
    tpu.vector_store %arg7[%c2_18, %c2_19, %c0_20, %c0_21], %23 {strides = array<i32>} : memref<3x20x24x4xf32, #tpu.memory_space<vmem>>, vector<1x16x14x4xf32>,
    %c0_22 = arith.constant 0 : index
    %c0_23 = arith.constant 0 : index
    %24 = vector.load %arg4[%c0_22, %c0_23] : memref<9x4xf32, #tpu.memory_space<vmem>>, vector<9x4xf32>
    %c0_24 = arith.constant 0 : index
    %c0_25 = arith.constant 0 : index
    %25 = vector.load %arg5[%c0_24, %c0_25] : memref<4x8xbf16, #tpu.memory_space<vmem>>, vector<4x8xbf16>
    %cst_26 = arith.constant 0.000000e+00 : f32
    %26 = vector.broadcast %cst_26 : f32 to vector<8x16x4xf32>
    %c0_27 = arith.constant 0 : index
    %c0_28 = arith.constant 0 : index
    %c0_29 = arith.constant 0 : index
    %c0_30 = arith.constant 0 : index
    %27 = vector.load %arg7[%c0_27, %c0_28, %c0_29, %c0_30] : memref<3x20x24x4xf32, #tpu.memory_space<vmem>>, vector<1x8x16x4xf32>
    %28 = vector.shape_cast %27 : vector<1x8x16x4xf32> to vector<8x16x4xf32>
    %29 = vector.extract_strided_slice %24 {offsets = [0, 0], sizes = [1, 4], strides = [1, 1]} : vector<9x4xf32> to vector<1x4xf32>
    %30 = vector.shape_cast %29 : vector<1x4xf32> to vector<4xf32>
    %31 = vector.shape_cast %30 : vector<4xf32> to vector<1x1x4xf32>
    %32 = vector.broadcast %31 : vector<1x1x4xf32> to vector<8x16x4xf32>
    %33 = arith.mulf %28, %32 : vector<8x16x4xf32>
    %34 = arith.addf %26, %33 : vector<8x16x4xf32>
    %c1_31 = arith.constant 1 : index
    %c0_32 = arith.constant 0 : index
    %c0_33 = arith.constant 0 : index
    %c0_34 = arith.constant 0 : index
    %35 = vector.load %arg7[%c1_31, %c0_32, %c0_33, %c0_34] : memref<3x20x24x4xf32, #tpu.memory_space<vmem>>, vector<1x8x16x4xf32>
    %36 = vector.shape_cast %35 : vector<1x8x16x4xf32> to vector<8x16x4xf32>
    %37 = vector.extract_strided_slice %24 {offsets = [1, 0], sizes = [1, 4], strides = [1, 1]} : vector<9x4xf32> to vector<1x4xf32>
    %38 = vector.shape_cast %37 : vector<1x4xf32> to vector<4xf32>
    %39 = vector.shape_cast %38 : vector<4xf32> to vector<1x1x4xf32>
    %40 = vector.broadcast %39 : vector<1x1x4xf32> to vector<8x16x4xf32>
    %41 = arith.mulf %36, %40 : vector<8x16x4xf32>
    %42 = arith.addf %34, %41 : vector<8x16x4xf32>
    %c2_35 = arith.constant 2 : index
    %c0_36 = arith.constant 0 : index
    %c0_37 = arith.constant 0 : index
    %c0_38 = arith.constant 0 : index
    %43 = vector.load %arg7[%c2_35, %c0_36, %c0_37, %c0_38] : memref<3x20x24x4xf32, #tpu.memory_space<vmem>>, vector<1x8x16x4xf32>
    %44 = vector.shape_cast %43 : vector<1x8x16x4xf32> to vector<8x16x4xf32>
    %45 = vector.extract_strided_slice %24 {offsets = [2, 0], sizes = [1, 4], strides = [1, 1]} : vector<9x4xf32> to vector<1x4xf32>
    %46 = vector.shape_cast %45 : vector<1x4xf32> to vector<4xf32>
    %47 = vector.shape_cast %46 : vector<4xf32> to vector<1x1x4xf32>
    %48 = vector.broadcast %47 : vector<1x1x4xf32> to vector<8x16x4xf32>
    %49 = arith.mulf %44, %48 : vector<8x16x4xf32>
    %50 = arith.addf %42, %49 : vector<8x16x4xf32>
    %c0_39 = arith.constant 0 : index
    %c2_40 = arith.constant 2 : index
    %c0_41 = arith.constant 0 : index
    %c0_42 = arith.constant 0 : index
    %51 = vector.load %arg7[%c0_39, %c2_40, %c0_41, %c0_42] : memref<3x20x24x4xf32, #tpu.memory_space<vmem>>, vector<1x8x16x4xf32>
    %52 = vector.shape_cast %51 : vector<1x8x16x4xf32> to vector<8x16x4xf32>
    %53 = vector.extract_strided_slice %24 {offsets = [3, 0], sizes = [1, 4], strides = [1, 1]} : vector<9x4xf32> to vector<1x4xf32>
    %54 = vector.shape_cast %53 : vector<1x4xf32> to vector<4xf32>
    %55 = vector.shape_cast %54 : vector<4xf32> to vector<1x1x4xf32>
    %56 = vector.broadcast %55 : vector<1x1x4xf32> to vector<8x16x4xf32>
    %57 = arith.mulf %52, %56 : vector<8x16x4xf32>
    %58 = arith.addf %50, %57 : vector<8x16x4xf32>
    %c1_43 = arith.constant 1 : index
    %c2_44 = arith.constant 2 : index
    %c0_45 = arith.constant 0 : index
    %c0_46 = arith.constant 0 : index
    %59 = vector.load %arg7[%c1_43, %c2_44, %c0_45, %c0_46] : memref<3x20x24x4xf32, #tpu.memory_space<vmem>>, vector<1x8x16x4xf32>
    %60 = vector.shape_cast %59 : vector<1x8x16x4xf32> to vector<8x16x4xf32>
    %61 = vector.extract_strided_slice %24 {offsets = [4, 0], sizes = [1, 4], strides = [1, 1]} : vector<9x4xf32> to vector<1x4xf32>
    %62 = vector.shape_cast %61 : vector<1x4xf32> to vector<4xf32>
    %63 = vector.shape_cast %62 : vector<4xf32> to vector<1x1x4xf32>
    %64 = vector.broadcast %63 : vector<1x1x4xf32> to vector<8x16x4xf32>
    %65 = arith.mulf %60, %64 : vector<8x16x4xf32>
    %66 = arith.addf %58, %65 : vector<8x16x4xf32>
    %c2_47 = arith.constant 2 : index
    %c2_48 = arith.constant 2 : index
    %c0_49 = arith.constant 0 : index
    %c0_50 = arith.constant 0 : index
    %67 = vector.load %arg7[%c2_47, %c2_48, %c0_49, %c0_50] : memref<3x20x24x4xf32, #tpu.memory_space<vmem>>, vector<1x8x16x4xf32>
    %68 = vector.shape_cast %67 : vector<1x8x16x4xf32> to vector<8x16x4xf32>
    %69 = vector.extract_strided_slice %24 {offsets = [5, 0], sizes = [1, 4], strides = [1, 1]} : vector<9x4xf32> to vector<1x4xf32>
    %70 = vector.shape_cast %69 : vector<1x4xf32> to vector<4xf32>
    %71 = vector.shape_cast %70 : vector<4xf32> to vector<1x1x4xf32>
    %72 = vector.broadcast %71 : vector<1x1x4xf32> to vector<8x16x4xf32>
    %73 = arith.mulf %68, %72 : vector<8x16x4xf32>
    %74 = arith.addf %66, %73 : vector<8x16x4xf32>
    %c0_51 = arith.constant 0 : index
    %c4 = arith.constant 4 : index
    %c0_52 = arith.constant 0 : index
    %c0_53 = arith.constant 0 : index
    %75 = vector.load %arg7[%c0_51, %c4, %c0_52, %c0_53] : memref<3x20x24x4xf32, #tpu.memory_space<vmem>>, vector<1x8x16x4xf32>
    %76 = vector.shape_cast %75 : vector<1x8x16x4xf32> to vector<8x16x4xf32>
    %77 = vector.extract_strided_slice %24 {offsets = [6, 0], sizes = [1, 4], strides = [1, 1]} : vector<9x4xf32> to vector<1x4xf32>
    %78 = vector.shape_cast %77 : vector<1x4xf32> to vector<4xf32>
    %79 = vector.shape_cast %78 : vector<4xf32> to vector<1x1x4xf32>
    %80 = vector.broadcast %79 : vector<1x1x4xf32> to vector<8x16x4xf32>
    %81 = arith.mulf %76, %80 : vector<8x16x4xf32>
    %82 = arith.addf %74, %81 : vector<8x16x4xf32>
    %c1_54 = arith.constant 1 : index
    %c4_55 = arith.constant 4 : index
    %c0_56 = arith.constant 0 : index
    %c0_57 = arith.constant 0 : index
    %83 = vector.load %arg7[%c1_54, %c4_55, %c0_56, %c0_57] : memref<3x20x24x4xf32, #tpu.memory_space<vmem>>, vector<1x8x16x4xf32>
    %84 = vector.shape_cast %83 : vector<1x8x16x4xf32> to vector<8x16x4xf32>
    %85 = vector.extract_strided_slice %24 {offsets = [7, 0], sizes = [1, 4], strides = [1, 1]} : vector<9x4xf32> to vector<1x4xf32>
    %86 = vector.shape_cast %85 : vector<1x4xf32> to vector<4xf32>
    %87 = vector.shape_cast %86 : vector<4xf32> to vector<1x1x4xf32>
    %88 = vector.broadcast %87 : vector<1x1x4xf32> to vector<8x16x4xf32>
    %89 = arith.mulf %84, %88 : vector<8x16x4xf32>
    %90 = arith.addf %82, %89 : vector<8x16x4xf32>
    %c2_58 = arith.constant 2 : index
    %c4_59 = arith.constant 4 : index
    %c0_60 = arith.constant 0 : index
    %c0_61 = arith.constant 0 : index
    %91 = vector.load %arg7[%c2_58, %c4_59, %c0_60, %c0_61] : memref<3x20x24x4xf32, #tpu.memory_space<vmem>>, vector<1x8x16x4xf32>
    %92 = vector.shape_cast %91 : vector<1x8x16x4xf32> to vector<8x16x4xf32>
    %93 = vector.extract_strided_slice %24 {offsets = [8, 0], sizes = [1, 4], strides = [1, 1]} : vector<9x4xf32> to vector<1x4xf32>
    %94 = vector.shape_cast %93 : vector<1x4xf32> to vector<4xf32>
    %95 = vector.shape_cast %94 : vector<4xf32> to vector<1x1x4xf32>
    %96 = vector.broadcast %95 : vector<1x1x4xf32> to vector<8x16x4xf32>
    %97 = arith.mulf %92, %96 : vector<8x16x4xf32>
    %98 = arith.addf %90, %97 : vector<8x16x4xf32>
    %99 = vector.shape_cast %98 : vector<8x16x4xf32> to vector<128x4xf32>
    %100 = arith.truncf %99 : vector<128x4xf32> to vector<128x4xbf16>
    %cst_62 = arith.constant dense<0.000000e+00> : vector<128x8xf32>
    %101 = tpu.matmul %100, %25, %cst_62 {dimension_numbers = #tpu.dot_dimension_numbers<[1], [0], [0], [1], [0, 0, 1, 1], [], []>} : vector<128x4xbf16>, vector<4x8xbf16>, vector<128x8xf32> -> vector<128x8xf32>
    %102 = vector.shape_cast %101 : vector<128x8xf32> to vector<8x16x8xf32>
    %c0_63 = arith.constant 0 : index
    %c0_64 = arith.constant 0 : index
    %c0_65 = arith.constant 0 : index
    %c0_66 = arith.constant 0 : index
    %103 = vector.load %arg6[%c0_63, %c0_64, %c0_65, %c0_66] : memref<1x16x16x8xf32, #tpu.memory_space<vmem>>, vector<1x8x16x8xf32>
    %104 = vector.shape_cast %103 : vector<1x8x16x8xf32> to vector<8x16x8xf32>
    %105 = vector.shape_cast %102 : vector<8x16x8xf32> to vector<1x8x16x8xf32>
    tpu.vector_store %arg6[%c0_63, %c0_64, %c0_65, %c0_66], %105 {strides = array<i32>} : memref<1x16x16x8xf32, #tpu.memory_space<vmem>>, vector<1x8x16x8xf32>,
    %cst_67 = arith.constant 0.000000e+00 : f32
    %106 = vector.broadcast %cst_67 : f32 to vector<8x16x4xf32>
    %c0_68 = arith.constant 0 : index
    %c8 = arith.constant 8 : index
    %c0_69 = arith.constant 0 : index
    %c0_70 = arith.constant 0 : index
    %107 = vector.load %arg7[%c0_68, %c8, %c0_69, %c0_70] : memref<3x20x24x4xf32, #tpu.memory_space<vmem>>, vector<1x8x16x4xf32>
    %108 = vector.shape_cast %107 : vector<1x8x16x4xf32> to vector<8x16x4xf32>
    %109 = vector.extract_strided_slice %24 {offsets = [0, 0], sizes = [1, 4], strides = [1, 1]} : vector<9x4xf32> to vector<1x4xf32>
    %110 = vector.shape_cast %109 : vector<1x4xf32> to vector<4xf32>
    %111 = vector.shape_cast %110 : vector<4xf32> to vector<1x1x4xf32>
    %112 = vector.broadcast %111 : vector<1x1x4xf32> to vector<8x16x4xf32>
    %113 = arith.mulf %108, %112 : vector<8x16x4xf32>
    %114 = arith.addf %106, %113 : vector<8x16x4xf32>
    %c1_71 = arith.constant 1 : index
    %c8_72 = arith.constant 8 : index
    %c0_73 = arith.constant 0 : index
    %c0_74 = arith.constant 0 : index
    %115 = vector.load %arg7[%c1_71, %c8_72, %c0_73, %c0_74] : memref<3x20x24x4xf32, #tpu.memory_space<vmem>>, vector<1x8x16x4xf32>
    %116 = vector.shape_cast %115 : vector<1x8x16x4xf32> to vector<8x16x4xf32>
    %117 = vector.extract_strided_slice %24 {offsets = [1, 0], sizes = [1, 4], strides = [1, 1]} : vector<9x4xf32> to vector<1x4xf32>
    %118 = vector.shape_cast %117 : vector<1x4xf32> to vector<4xf32>
    %119 = vector.shape_cast %118 : vector<4xf32> to vector<1x1x4xf32>
    %120 = vector.broadcast %119 : vector<1x1x4xf32> to vector<8x16x4xf32>
    %121 = arith.mulf %116, %120 : vector<8x16x4xf32>
    %122 = arith.addf %114, %121 : vector<8x16x4xf32>
    %c2_75 = arith.constant 2 : index
    %c8_76 = arith.constant 8 : index
    %c0_77 = arith.constant 0 : index
    %c0_78 = arith.constant 0 : index
    %123 = vector.load %arg7[%c2_75, %c8_76, %c0_77, %c0_78] : memref<3x20x24x4xf32, #tpu.memory_space<vmem>>, vector<1x8x16x4xf32>
    %124 = vector.shape_cast %123 : vector<1x8x16x4xf32> to vector<8x16x4xf32>
    %125 = vector.extract_strided_slice %24 {offsets = [2, 0], sizes = [1, 4], strides = [1, 1]} : vector<9x4xf32> to vector<1x4xf32>
    %126 = vector.shape_cast %125 : vector<1x4xf32> to vector<4xf32>
    %127 = vector.shape_cast %126 : vector<4xf32> to vector<1x1x4xf32>
    %128 = vector.broadcast %127 : vector<1x1x4xf32> to vector<8x16x4xf32>
    %129 = arith.mulf %124, %128 : vector<8x16x4xf32>
    %130 = arith.addf %122, %129 : vector<8x16x4xf32>
    %c0_79 = arith.constant 0 : index
    %c10 = arith.constant 10 : index
    %c0_80 = arith.constant 0 : index
    %c0_81 = arith.constant 0 : index
    %131 = vector.load %arg7[%c0_79, %c10, %c0_80, %c0_81] : memref<3x20x24x4xf32, #tpu.memory_space<vmem>>, vector<1x8x16x4xf32>
    %132 = vector.shape_cast %131 : vector<1x8x16x4xf32> to vector<8x16x4xf32>
    %133 = vector.extract_strided_slice %24 {offsets = [3, 0], sizes = [1, 4], strides = [1, 1]} : vector<9x4xf32> to vector<1x4xf32>
    %134 = vector.shape_cast %133 : vector<1x4xf32> to vector<4xf32>
    %135 = vector.shape_cast %134 : vector<4xf32> to vector<1x1x4xf32>
    %136 = vector.broadcast %135 : vector<1x1x4xf32> to vector<8x16x4xf32>
    %137 = arith.mulf %132, %136 : vector<8x16x4xf32>
    %138 = arith.addf %130, %137 : vector<8x16x4xf32>
    %c1_82 = arith.constant 1 : index
    %c10_83 = arith.constant 10 : index
    %c0_84 = arith.constant 0 : index
    %c0_85 = arith.constant 0 : index
    %139 = vector.load %arg7[%c1_82, %c10_83, %c0_84, %c0_85] : memref<3x20x24x4xf32, #tpu.memory_space<vmem>>, vector<1x8x16x4xf32>
    %140 = vector.shape_cast %139 : vector<1x8x16x4xf32> to vector<8x16x4xf32>
    %141 = vector.extract_strided_slice %24 {offsets = [4, 0], sizes = [1, 4], strides = [1, 1]} : vector<9x4xf32> to vector<1x4xf32>
    %142 = vector.shape_cast %141 : vector<1x4xf32> to vector<4xf32>
    %143 = vector.shape_cast %142 : vector<4xf32> to vector<1x1x4xf32>
    %144 = vector.broadcast %143 : vector<1x1x4xf32> to vector<8x16x4xf32>
    %145 = arith.mulf %140, %144 : vector<8x16x4xf32>
    %146 = arith.addf %138, %145 : vector<8x16x4xf32>
    %c2_86 = arith.constant 2 : index
    %c10_87 = arith.constant 10 : index
    %c0_88 = arith.constant 0 : index
    %c0_89 = arith.constant 0 : index
    %147 = vector.load %arg7[%c2_86, %c10_87, %c0_88, %c0_89] : memref<3x20x24x4xf32, #tpu.memory_space<vmem>>, vector<1x8x16x4xf32>
    %148 = vector.shape_cast %147 : vector<1x8x16x4xf32> to vector<8x16x4xf32>
    %149 = vector.extract_strided_slice %24 {offsets = [5, 0], sizes = [1, 4], strides = [1, 1]} : vector<9x4xf32> to vector<1x4xf32>
    %150 = vector.shape_cast %149 : vector<1x4xf32> to vector<4xf32>
    %151 = vector.shape_cast %150 : vector<4xf32> to vector<1x1x4xf32>
    %152 = vector.broadcast %151 : vector<1x1x4xf32> to vector<8x16x4xf32>
    %153 = arith.mulf %148, %152 : vector<8x16x4xf32>
    %154 = arith.addf %146, %153 : vector<8x16x4xf32>
    %c0_90 = arith.constant 0 : index
    %c12 = arith.constant 12 : index
    %c0_91 = arith.constant 0 : index
    %c0_92 = arith.constant 0 : index
    %155 = vector.load %arg7[%c0_90, %c12, %c0_91, %c0_92] : memref<3x20x24x4xf32, #tpu.memory_space<vmem>>, vector<1x8x16x4xf32>
    %156 = vector.shape_cast %155 : vector<1x8x16x4xf32> to vector<8x16x4xf32>
    %157 = vector.extract_strided_slice %24 {offsets = [6, 0], sizes = [1, 4], strides = [1, 1]} : vector<9x4xf32> to vector<1x4xf32>
    %158 = vector.shape_cast %157 : vector<1x4xf32> to vector<4xf32>
    %159 = vector.shape_cast %158 : vector<4xf32> to vector<1x1x4xf32>
    %160 = vector.broadcast %159 : vector<1x1x4xf32> to vector<8x16x4xf32>
    %161 = arith.mulf %156, %160 : vector<8x16x4xf32>
    %162 = arith.addf %154, %161 : vector<8x16x4xf32>
    %c1_93 = arith.constant 1 : index
    %c12_94 = arith.constant 12 : index
    %c0_95 = arith.constant 0 : index
    %c0_96 = arith.constant 0 : index
    %163 = vector.load %arg7[%c1_93, %c12_94, %c0_95, %c0_96] : memref<3x20x24x4xf32, #tpu.memory_space<vmem>>, vector<1x8x16x4xf32>
    %164 = vector.shape_cast %163 : vector<1x8x16x4xf32> to vector<8x16x4xf32>
    %165 = vector.extract_strided_slice %24 {offsets = [7, 0], sizes = [1, 4], strides = [1, 1]} : vector<9x4xf32> to vector<1x4xf32>
    %166 = vector.shape_cast %165 : vector<1x4xf32> to vector<4xf32>
    %167 = vector.shape_cast %166 : vector<4xf32> to vector<1x1x4xf32>
    %168 = vector.broadcast %167 : vector<1x1x4xf32> to vector<8x16x4xf32>
    %169 = arith.mulf %164, %168 : vector<8x16x4xf32>
    %170 = arith.addf %162, %169 : vector<8x16x4xf32>
    %c2_97 = arith.constant 2 : index
    %c12_98 = arith.constant 12 : index
    %c0_99 = arith.constant 0 : index
    %c0_100 = arith.constant 0 : index
    %171 = vector.load %arg7[%c2_97, %c12_98, %c0_99, %c0_100] : memref<3x20x24x4xf32, #tpu.memory_space<vmem>>, vector<1x8x16x4xf32>
    %172 = vector.shape_cast %171 : vector<1x8x16x4xf32> to vector<8x16x4xf32>
    %173 = vector.extract_strided_slice %24 {offsets = [8, 0], sizes = [1, 4], strides = [1, 1]} : vector<9x4xf32> to vector<1x4xf32>
    %174 = vector.shape_cast %173 : vector<1x4xf32> to vector<4xf32>
    %175 = vector.shape_cast %174 : vector<4xf32> to vector<1x1x4xf32>
    %176 = vector.broadcast %175 : vector<1x1x4xf32> to vector<8x16x4xf32>
    %177 = arith.mulf %172, %176 : vector<8x16x4xf32>
    %178 = arith.addf %170, %177 : vector<8x16x4xf32>
    %179 = vector.shape_cast %178 : vector<8x16x4xf32> to vector<128x4xf32>
    %180 = arith.truncf %179 : vector<128x4xf32> to vector<128x4xbf16>
    %cst_101 = arith.constant dense<0.000000e+00> : vector<128x8xf32>
    %181 = tpu.matmul %180, %25, %cst_101 {dimension_numbers = #tpu.dot_dimension_numbers<[1], [0], [0], [1], [0, 0, 1, 1], [], []>} : vector<128x4xbf16>, vector<4x8xbf16>, vector<128x8xf32> -> vector<128x8xf32>
    %182 = vector.shape_cast %181 : vector<128x8xf32> to vector<8x16x8xf32>
    %c0_102 = arith.constant 0 : index
    %c8_103 = arith.constant 8 : index
    %c0_104 = arith.constant 0 : index
    %c0_105 = arith.constant 0 : index
    %183 = vector.load %arg6[%c0_102, %c8_103, %c0_104, %c0_105] : memref<1x16x16x8xf32, #tpu.memory_space<vmem>>, vector<1x8x16x8xf32>
    %184 = vector.shape_cast %183 : vector<1x8x16x8xf32> to vector<8x16x8xf32>
    %185 = vector.shape_cast %182 : vector<8x16x8xf32> to vector<1x8x16x8xf32>
    tpu.vector_store %arg6[%c0_102, %c8_103, %c0_104, %c0_105], %185 {strides = array<i32>} : memref<1x16x16x8xf32, #tpu.memory_space<vmem>>, vector<1x8x16x8xf32>,
    return
  }
  func.func @transform_0(%arg0: i32) -> (i32, i32, i32, i32) {
    %c0_i32 = arith.constant 0 : i32
    %c0_i32_0 = arith.constant 0 : i32
    %c0_i32_1 = arith.constant 0 : i32
    %c0_i32_2 = arith.constant 0 : i32
    return %arg0, %c0_i32, %c0_i32_0, %c0_i32_1 : i32, i32, i32, i32
  }
  func.func @transform_1(%arg0: i32) -> (i32, i32) {
    %c0_i32 = arith.constant 0 : i32
    %c0_i32_0 = arith.constant 0 : i32
    %c0_i32_1 = arith.constant 0 : i32
    return %c0_i32, %c0_i32_0 : i32, i32
  }
  func.func @transform_2(%arg0: i32) -> (i32, i32) {
    %c0_i32 = arith.constant 0 : i32
    %c0_i32_0 = arith.constant 0 : i32
    %c0_i32_1 = arith.constant 0 : i32
    return %c0_i32, %c0_i32_0 : i32, i32
  }
  func.func @transform_3(%arg0: i32) -> (i32, i32) {
    %c0_i32 = arith.constant 0 : i32
    %c0_i32_0 = arith.constant 0 : i32
    %c0_i32_1 = arith.constant 0 : i32
    return %c0_i32, %c0_i32_0 : i32, i32
  }
  func.func @transform_4(%arg0: i32) -> (i32, i32) {
    %c0_i32 = arith.constant 0 : i32
    %c0_i32_0 = arith.constant 0 : i32
    %c0_i32_1 = arith.constant 0 : i32
    return %c0_i32, %c0_i32_0 : i32, i32
  }
  func.func @transform_5(%arg0: i32) -> (i32, i32, i32, i32) {
    %c0_i32 = arith.constant 0 : i32
    %c0_i32_0 = arith.constant 0 : i32
    %c0_i32_1 = arith.constant 0 : i32
    %c0_i32_2 = arith.constant 0 : i32
    return %arg0, %c0_i32, %c0_i32_0, %c0_i32_1 : i32, i32, i32, i32
  }
}

</mosaic_0001>

<llo_original>
// kernel: tpu_custom_call.1
$region0: #{tpu_custom_call.1}
  #allocation0 [shape = 'u32[]', space=smem, size = 0x4, offset = 0x4, fixed_abs, tag = 'smem constant byte address 0x4 - core index']
  #allocation1 [shape = 'u32[144,128]{1,0:T(1,128)}', space=vmem, size = 0x12000, scoped, tag = 'internal scratch']
  #allocation2 [shape = 'f32[3,20,24,4]{3,2,1,0:T(8,128)}', space=vmem, size = 0xb4000, scoped, tag = 'scratch operand']
  %s0 = inlined_call_operand.vmem [shape: f32[2,16,16,4], index: 0, kind: input, shape index: {}]
  %s1 = inlined_call_operand.vmem [shape: f32[1,4], index: 1, kind: input, shape index: {}]
  %s2 = inlined_call_operand.vmem [shape: f32[1,4], index: 2, kind: input, shape index: {}]
  %s3 = inlined_call_operand.vmem [shape: f32[9,4], index: 3, kind: input, shape index: {}]
  %s4 = inlined_call_operand.vmem [shape: bf16[4,8], index: 4, kind: input, shape index: {}]
  %s5 = inlined_call_operand.vmem [shape: f32[2,16,16,8], index: 5, kind: output, shape index: {}]
  %s6 = sld [smem:[#allocation0]]
  $region53: #{tpu_custom_call.1} parent=0
    _
  %s8 = ssub.s32 1, %s6
  %s9 = scalar_select 0, %s8, %s6
  loop: start=0, step=1, limit=4
  $region2: #{tpu_custom_call.1} parent=0 // loop_pre_header
    _
  $region3: #{tpu_custom_call.1} parent=0 // loop_header
    %s11 = sphi 0, %s15
    %p12 = scmp.ge.s32.totalorder %s11, 4
    %s21 = sphi 0, %s23
    %s24 = sphi 0, %s21
    %s25 = sphi 0, %s24
    %s41 = sphi 0, %s25
    %s45 = sphi 0, %s45
    %s47 = sphi 0, %s45
    %s48 = sphi 0, %s47
    %s62 = sphi 0, %s48
    %s66 = sphi 0, %s66
    %s68 = sphi 0, %s66
    %s69 = sphi 0, %s68
    %s83 = sphi 0, %s69
    %s87 = sphi 0, %s87
    %s89 = sphi 0, %s87
    %s90 = sphi 0, %s89
    %s104 = sphi 0, %s90
    %s108 = sphi 0, %s108
    %s110 = sphi 0, %s108
    %s111 = sphi 0, %s110
    %s125 = sphi 0, %s111
    %s131 = sphi 0, %s133
    %s134 = sphi 0, %s131
    %s135 = sphi 0, %s134
    %s151 = sphi 0, %s135
  $region4: #{tpu_custom_call.1} parent=0 // loop_header_branch
    %14 = sbr.rel (%p12) target = $region8
  $region5: #{tpu_custom_call.1} parent=0 // loop_body
    %s16 = ssub.s32 %s11, 1
    %s17 = ssub.s32 %s11, 2
    %s18 = sadd.s32 %s11, 1
    %s19 = ssub.s32 %s11, %s18
    %p20 = scmp.eq.s32.totalorder %s19, 0
    %s22 = sadd.s32 %s21, 1
    %s23 = scalar_select %p20, %s21, %s22
    %p26 = pneg %p20
    %p27 = scmp.eq.s32.totalorder %s11, 1
    %p28 = por %p26, %p27
    %p29 = scmp.ne.s32.totalorder %s21, %s24
    %p30 = scmp.eq.s32.totalorder %s11, 0
    %p31 = por %p29, %p30
    %p32 = scmp.ne.s32.totalorder %s21, %s24
    %p33 = scmp.eq.s32.totalorder %s16, 1
    %p34 = por %p32, %p33
    %p35 = scmp.ne.s32.totalorder %s24, %s25
    %p36 = scmp.eq.s32.totalorder %s16, 0
    %p37 = por %p35, %p36
    %p38 = scmp.ne.s32.totalorder %s24, %s25
    %p39 = scmp.eq.s32.totalorder %s17, 1
    %p40 = por %p38, %p39
    %p42 = scmp.ne.s32.totalorder %s25, %s41
    %p43 = scmp.eq.s32.totalorder %s17, 0
    %p44 = por %p42, %p43
    %s46 = sadd.s32 %s45, 1
    %p49 = scmp.eq.s32.totalorder %s11, 1
    %p50 = scmp.ne.s32.totalorder %s45, %s47
    %p51 = scmp.eq.s32.totalorder %s11, 0
    %p52 = por %p50, %p51
    %p53 = scmp.ne.s32.totalorder %s45, %s47
    %p54 = scmp.eq.s32.totalorder %s16, 1
    %p55 = por %p53, %p54
    %p56 = scmp.ne.s32.totalorder %s47, %s48
    %p57 = scmp.eq.s32.totalorder %s16, 0
    %p58 = por %p56, %p57
    %p59 = scmp.ne.s32.totalorder %s47, %s48
    %p60 = scmp.eq.s32.totalorder %s17, 1
    %p61 = por %p59, %p60
    %p63 = scmp.ne.s32.totalorder %s48, %s62
    %p64 = scmp.eq.s32.totalorder %s17, 0
    %p65 = por %p63, %p64
    %s67 = sadd.s32 %s66, 1
    %p70 = scmp.eq.s32.totalorder %s11, 1
    %p71 = scmp.ne.s32.totalorder %s66, %s68
    %p72 = scmp.eq.s32.totalorder %s11, 0
    %p73 = por %p71, %p72
    %p74 = scmp.ne.s32.totalorder %s66, %s68
    %p75 = scmp.eq.s32.totalorder %s16, 1
    %p76 = por %p74, %p75
    %p77 = scmp.ne.s32.totalorder %s68, %s69
    %p78 = scmp.eq.s32.totalorder %s16, 0
    %p79 = por %p77, %p78
    %p80 = scmp.ne.s32.totalorder %s68, %s69
    %p81 = scmp.eq.s32.totalorder %s17, 1
    %p82 = por %p80, %p81
    %p84 = scmp.ne.s32.totalorder %s69, %s83
    %p85 = scmp.eq.s32.totalorder %s17, 0
    %p86 = por %p84, %p85
    %s88 = sadd.s32 %s87, 1
    %p91 = scmp.eq.s32.totalorder %s11, 1
    %p92 = scmp.ne.s32.totalorder %s87, %s89
    %p93 = scmp.eq.s32.totalorder %s11, 0
    %p94 = por %p92, %p93
    %p95 = scmp.ne.s32.totalorder %s87, %s89
    %p96 = scmp.eq.s32.totalorder %s16, 1
    %p97 = por %p95, %p96
    %p98 = scmp.ne.s32.totalorder %s89, %s90
    %p99 = scmp.eq.s32.totalorder %s16, 0
    %p100 = por %p98, %p99
    %p101 = scmp.ne.s32.totalorder %s89, %s90
    %p102 = scmp.eq.s32.totalorder %s17, 1
    %p103 = por %p101, %p102
    %p105 = scmp.ne.s32.totalorder %s90, %s104
    %p106 = scmp.eq.s32.totalorder %s17, 0
    %p107 = por %p105, %p106
    %s109 = sadd.s32 %s108, 1
    %p112 = scmp.eq.s32.totalorder %s11, 1
    %p113 = scmp.ne.s32.totalorder %s108, %s110
    %p114 = scmp.eq.s32.totalorder %s11, 0
    %p115 = por %p113, %p114
    %p116 = scmp.ne.s32.totalorder %s108, %s110
    %p117 = scmp.eq.s32.totalorder %s16, 1
    %p118 = por %p116, %p117
    %p119 = scmp.ne.s32.totalorder %s110, %s111
    %p120 = scmp.eq.s32.totalorder %s16, 0
    %p121 = por %p119, %p120
    %p122 = scmp.ne.s32.totalorder %s110, %s111
    %p123 = scmp.eq.s32.totalorder %s17, 1
    %p124 = por %p122, %p123
    %p126 = scmp.ne.s32.totalorder %s111, %s125
    %p127 = scmp.eq.s32.totalorder %s17, 0
    %p128 = por %p126, %p127
    %s129 = ssub.s32 %s11, %s18
    %p130 = scmp.eq.s32.totalorder %s129, 0
    %s132 = sadd.s32 %s131, 1
    %s133 = scalar_select %p130, %s131, %s132
    %p136 = pneg %p130
    %p137 = scmp.eq.s32.totalorder %s11, 1
    %p138 = por %p136, %p137
    %p139 = scmp.ne.s32.totalorder %s131, %s134
    %p140 = scmp.eq.s32.totalorder %s11, 0
    %p141 = por %p139, %p140
    %p142 = scmp.ne.s32.totalorder %s131, %s134
    %p143 = scmp.eq.s32.totalorder %s16, 1
    %p144 = por %p142, %p143
    %p145 = scmp.ne.s32.totalorder %s134, %s135
    %p146 = scmp.eq.s32.totalorder %s16, 0
    %p147 = por %p145, %p146
    %p148 = scmp.ne.s32.totalorder %s134, %s135
    %p149 = scmp.eq.s32.totalorder %s17, 1
    %p150 = por %p148, %p149
    %p152 = scmp.ne.s32.totalorder %s135, %s151
    %p153 = scmp.eq.s32.totalorder %s17, 0
    %p154 = por %p152, %p153
    %p155 = scmp.le.s32.totalorder 1, %s11
    %p156 = scmp.lt.s32.totalorder %s11, 3
    %p157 = pnand %p155, %p156
    %p158 = pneg %p157
    // Predicated region
    $region9: #{tpu_custom_call.1} parent=5 // pred_check
      _
    $region10: #{tpu_custom_call.1} parent=5 // pred_check_branch
      %160 = sbr.rel (%p157) target = $region12
    $region11: #{tpu_custom_call.1} parent=5 // pred_region
      %s161 = ssub.s32 %s11, 1
      // Predicated region
      $region13: #{tpu_custom_call.1} parent=11 // pred_check
        %p162 = pneg %p58
      $region14: #{tpu_custom_call.1} parent=11 // pred_check_branch
        %164 = sbr.rel (%p162) target = $region16
      $region15: #{tpu_custom_call.1} parent=11 // pred_region
        _
      $region16: #{tpu_custom_call.1} parent=11 // pred_fallthru
        _
      // Predicated region
      $region17: #{tpu_custom_call.1} parent=11 // pred_check
        %p165 = pneg %p79
      $region18: #{tpu_custom_call.1} parent=11 // pred_check_branch
        %167 = sbr.rel (%p165) target = $region20
      $region19: #{tpu_custom_call.1} parent=11 // pred_region
        _
      $region20: #{tpu_custom_call.1} parent=11 // pred_fallthru
        _
      // Predicated region
      $region21: #{tpu_custom_call.1} parent=11 // pred_check
        %p168 = pneg %p100
      $region22: #{tpu_custom_call.1} parent=11 // pred_check_branch
        %170 = sbr.rel (%p168) target = $region24
      $region23: #{tpu_custom_call.1} parent=11 // pred_region
        _
      $region24: #{tpu_custom_call.1} parent=11 // pred_fallthru
        _
      // Predicated region
      $region25: #{tpu_custom_call.1} parent=11 // pred_check
        %p171 = pneg %p121
      $region26: #{tpu_custom_call.1} parent=11 // pred_check_branch
        %173 = sbr.rel (%p171) target = $region28
      $region27: #{tpu_custom_call.1} parent=11 // pred_region
        _
      $region28: #{tpu_custom_call.1} parent=11 // pred_fallthru
        _
    $region12: #{tpu_custom_call.1} parent=5 // pred_fallthru
      _
    %p174 = scmp.lt.s32.totalorder %s11, 2
    // Predicated region
    $region29: #{tpu_custom_call.1} parent=5 // pred_check
      %p175 = pneg %p174
    $region30: #{tpu_custom_call.1} parent=5 // pred_check_branch
      %177 = sbr.rel (%p175) target = $region32
    $region31: #{tpu_custom_call.1} parent=5 // pred_region
      // Predicated region
      $region33: #{tpu_custom_call.1} parent=31 // pred_check
        %p178 = pneg %p31
      $region34: #{tpu_custom_call.1} parent=31 // pred_check_branch
        %180 = sbr.rel (%p178) target = $region36
      $region35: #{tpu_custom_call.1} parent=31 // pred_region
        %p181 = scmp.lt.s32.totalorder %s11, 1
        %s182 = scalar_select %p181, %s11, 1
        %s183 = smul.addr %s182, 32
        %s184 = smul.addr %s183, 8
        %s185 = scalar_lea.vmem %s0, %s184
      $region36: #{tpu_custom_call.1} parent=31 // pred_fallthru
        _
    $region32: #{tpu_custom_call.1} parent=5 // pred_fallthru
      _
    %p186 = scmp.le.s32.totalorder 1, %s11
    %p187 = scmp.lt.s32.totalorder %s11, 3
    %p188 = pnand %p186, %p187
    %p189 = pneg %p188
    // Predicated region
    $region37: #{tpu_custom_call.1} parent=5 // pred_check
      _
    $region38: #{tpu_custom_call.1} parent=5 // pred_check_branch
      %191 = sbr.rel (%p188) target = $region40
    $region39: #{tpu_custom_call.1} parent=5 // pred_region
      %s192 = ssub.s32 %s11, 1
      %p193 = scmp.lt.s32.totalorder %s16, 1
      %s194 = scalar_select %p193, %s16, 1
      %s195 = smul.addr %s194, 32
      %s196 = smul.addr %s195, 8
      %s197 = scalar_lea.vmem %s0, %s196
      %p198 = pneg %p37
      %p199 = pneg %p34
      %p200 = pneg %p58
      %p201 = pneg %p55
      %p202 = pneg %p79
      %p203 = pneg %p76
      %p204 = pneg %p100
      %p205 = pneg %p97
      %p206 = pneg %p121
      %p207 = pneg %p118
      %p208 = pneg %p147
      %p209 = pneg %p144
      %p210 = scmp.lt.s32.totalorder %s16, 1
      %s211 = scalar_select %p210, %s16, 1
      %s212 = smul.addr %s211, 32
      %s213 = smul.addr %s212, 8
      %s214 = scalar_lea.vmem %s5, %s213
      %p215 = scmp.lt.s32.totalorder %s16, 1
      %s216 = scalar_select %p215, %s16, 1
      %s217 = smul.addr %s216, 32
      %s218 = smul.addr %s217, 8
      %s219 = scalar_lea.vmem %s0, %s218
      %p220 = scmp.lt.s32.totalorder %s16, 1
      %s221 = scalar_select %p220, %s16, 1
      %s222 = smul.addr %s221, 32
      %s223 = smul.addr %s222, 8
      %s224 = scalar_lea.vmem %s5, %s223
      %v226 = vld [vmem:[%s219] sm:$0xff]
      %v227 = vld [vmem:[%s219 + $0x8] sm:$0xff]
      %v228 = vld [vmem:[%s219 + $0x10] sm:$0xff]
      %v229 = vld [vmem:[%s219 + $0x18] sm:$0xff]
      %v230 = vld [vmem:[%s219 + $0x20] sm:$0xff]
      %v231 = vld [vmem:[%s219 + $0x28] sm:$0xff]
      %v232 = vld [vmem:[%s219 + $0x30] sm:$0xff]
      %v233 = vld [vmem:[%s219 + $0x38] sm:$0xff]
      %v234 = vld [vmem:[%s219 + $0x40] sm:$0xff]
      %v235 = vld [vmem:[%s219 + $0x48] sm:$0xff]
      %v236 = vld [vmem:[%s219 + $0x50] sm:$0xff]
      %v237 = vld [vmem:[%s219 + $0x58] sm:$0xff]
      %v238 = vld [vmem:[%s219 + $0x60] sm:$0xff]
      %v239 = vld [vmem:[%s219 + $0x68] sm:$0xff]
      %v240 = vld [vmem:[%s219 + $0x70] sm:$0xff]
      %v241 = vld [vmem:[%s219 + $0x78] sm:$0xff]
      %v242 = vld [vmem:[%s219 + $0x80] sm:$0xff]
      %v243 = vld [vmem:[%s219 + $0x88] sm:$0xff]
      %v244 = vld [vmem:[%s219 + $0x90] sm:$0xff]
      %v245 = vld [vmem:[%s219 + $0x98] sm:$0xff]
      %v246 = vld [vmem:[%s219 + $0xa0] sm:$0xff]
      %v247 = vld [vmem:[%s219 + $0xa8] sm:$0xff]
      %v248 = vld [vmem:[%s219 + $0xb0] sm:$0xff]
      %v249 = vld [vmem:[%s219 + $0xb8] sm:$0xff]
      %v250 = vld [vmem:[%s219 + $0xc0] sm:$0xff]
      %v251 = vld [vmem:[%s219 + $0xc8] sm:$0xff]
      %v252 = vld [vmem:[%s219 + $0xd0] sm:$0xff]
      %v253 = vld [vmem:[%s219 + $0xd8] sm:$0xff]
      %v254 = vld [vmem:[%s219 + $0xe0] sm:$0xff]
      %v255 = vld [vmem:[%s219 + $0xe8] sm:$0xff]
      %v256 = vld [vmem:[%s219 + $0xf0] sm:$0xff]
      %v257 = vld [vmem:[%s219 + $0xf8] sm:$0xff]
      %v258 = vld [vmem:[%s1] sm:$0x1]
      %v260 = vlaneseq
      %v261 = vshrl.u32 %v260, 7
      %v262 = vsub.s32 0, %v261
      %v263 = vrot.slane %v258, %v262
      %v265 = vmul.f32 %v226, %v263
      %v266 = vmul.f32 %v227, %v263
      %v267 = vmul.f32 %v228, %v263
      %v268 = vmul.f32 %v229, %v263
      %v269 = vmul.f32 %v230, %v263
      %v270 = vmul.f32 %v231, %v263
      %v271 = vmul.f32 %v232, %v263
      %v272 = vmul.f32 %v233, %v263
      %v273 = vmul.f32 %v234, %v263
      %v274 = vmul.f32 %v235, %v263
      %v275 = vmul.f32 %v236, %v263
      %v276 = vmul.f32 %v237, %v263
      %v277 = vmul.f32 %v238, %v263
      %v278 = vmul.f32 %v239, %v263
      %v279 = vmul.f32 %v240, %v263
      %v280 = vmul.f32 %v241, %v263
      %v281 = vmul.f32 %v242, %v263
      %v282 = vmul.f32 %v243, %v263
      %v283 = vmul.f32 %v244, %v263
      %v284 = vmul.f32 %v245, %v263
      %v285 = vmul.f32 %v246, %v263
      %v286 = vmul.f32 %v247, %v263
      %v287 = vmul.f32 %v248, %v263
      %v288 = vmul.f32 %v249, %v263
      %v289 = vmul.f32 %v250, %v263
      %v290 = vmul.f32 %v251, %v263
      %v291 = vmul.f32 %v252, %v263
      %v292 = vmul.f32 %v253, %v263
      %v293 = vmul.f32 %v254, %v263
      %v294 = vmul.f32 %v255, %v263
      %v295 = vmul.f32 %v256, %v263
      %v296 = vmul.f32 %v257, %v263
      %v297 = vld [vmem:[%s2] sm:$0x1]
      %v299 = vlaneseq
      %v300 = vshrl.u32 %v299, 7
      %v301 = vsub.s32 0, %v300
      %v302 = vrot.slane %v297, %v301
      %v304 = vadd.f32 %v265, %v302
      %v305 = vadd.f32 %v266, %v302
      %v306 = vadd.f32 %v267, %v302
      %v307 = vadd.f32 %v268, %v302
      %v308 = vadd.f32 %v269, %v302
      %v309 = vadd.f32 %v270, %v302
      %v310 = vadd.f32 %v271, %v302
      %v311 = vadd.f32 %v272, %v302
      %v312 = vadd.f32 %v273, %v302
      %v313 = vadd.f32 %v274, %v302
      %v314 = vadd.f32 %v275, %v302
      %v315 = vadd.f32 %v276, %v302
      %v316 = vadd.f32 %v277, %v302
      %v317 = vadd.f32 %v278, %v302
      %v318 = vadd.f32 %v279, %v302
      %v319 = vadd.f32 %v280, %v302
      %v320 = vadd.f32 %v281, %v302
      %v321 = vadd.f32 %v282, %v302
      %v322 = vadd.f32 %v283, %v302
      %v323 = vadd.f32 %v284, %v302
      %v324 = vadd.f32 %v285, %v302
      %v325 = vadd.f32 %v286, %v302
      %v326 = vadd.f32 %v287, %v302
      %v327 = vadd.f32 %v288, %v302
      %v328 = vadd.f32 %v289, %v302
      %v329 = vadd.f32 %v290, %v302
      %v330 = vadd.f32 %v291, %v302
      %v331 = vadd.f32 %v292, %v302
      %v332 = vadd.f32 %v293, %v302
      %v333 = vadd.f32 %v294, %v302
      %v334 = vadd.f32 %v295, %v302
      %v335 = vadd.f32 %v296, %v302
      %v336 = vmax.f32 %v304, 0.0
      %v337 = vmax.f32 %v305, 0.0
      %v338 = vmax.f32 %v306, 0.0
      %v339 = vmax.f32 %v307, 0.0
      %v340 = vmax.f32 %v308, 0.0
      %v341 = vmax.f32 %v309, 0.0
      %v342 = vmax.f32 %v310, 0.0
      %v343 = vmax.f32 %v311, 0.0
      %v344 = vmax.f32 %v312, 0.0
      %v345 = vmax.f32 %v313, 0.0
      %v346 = vmax.f32 %v314, 0.0
      %v347 = vmax.f32 %v315, 0.0
      %v348 = vmax.f32 %v316, 0.0
      %v349 = vmax.f32 %v317, 0.0
      %v350 = vmax.f32 %v318, 0.0
      %v351 = vmax.f32 %v319, 0.0
      %v352 = vmax.f32 %v320, 0.0
      %v353 = vmax.f32 %v321, 0.0
      %v354 = vmax.f32 %v322, 0.0
      %v355 = vmax.f32 %v323, 0.0
      %v356 = vmax.f32 %v324, 0.0
      %v357 = vmax.f32 %v325, 0.0
      %v358 = vmax.f32 %v326, 0.0
      %v359 = vmax.f32 %v327, 0.0
      %v360 = vmax.f32 %v328, 0.0
      %v361 = vmax.f32 %v329, 0.0
      %v362 = vmax.f32 %v330, 0.0
      %v363 = vmax.f32 %v331, 0.0
      %v364 = vmax.f32 %v332, 0.0
      %v365 = vmax.f32 %v333, 0.0
      %v366 = vmax.f32 %v334, 0.0
      %v367 = vmax.f32 %v335, 0.0
      %vm368 = vcmask 31744
      %369 = vst.msk [vmem:[#allocation2] sm:$0xff] %vm368, 0.0
      %370 = vst.msk [vmem:[#allocation2 + $0x8] sm:$0xff] %vm368, 0.0
      %371 = vst.msk [vmem:[#allocation2 + $0x10] sm:$0xff] %vm368, 0.0
      %372 = vst.msk [vmem:[#allocation2 + $0x18] sm:$0xff] %vm368, 0.0
      %373 = vst.msk [vmem:[#allocation2 + $0x20] sm:$0xff] %vm368, 0.0
      %374 = vst.msk [vmem:[#allocation2 + $0x28] sm:$0xff] %vm368, 0.0
      %375 = vst.msk [vmem:[#allocation2 + $0x30] sm:$0xff] %vm368, 0.0
      %376 = vst.msk [vmem:[#allocation2 + $0x38] sm:$0xff] %vm368, 0.0
      %377 = vst.msk [vmem:[#allocation2 + $0x40] sm:$0xff] %vm368, 0.0
      %378 = vst.msk [vmem:[#allocation2 + $0x48] sm:$0xff] %vm368, 0.0
      %379 = vst.msk [vmem:[#allocation2 + $0x50] sm:$0xff] %vm368, 0.0
      %380 = vst.msk [vmem:[#allocation2 + $0x58] sm:$0xff] %vm368, 0.0
      %381 = vst.msk [vmem:[#allocation2 + $0x60] sm:$0xff] %vm368, 0.0
      %382 = vst.msk [vmem:[#allocation2 + $0x68] sm:$0xff] %vm368, 0.0
      %383 = vst.msk [vmem:[#allocation2 + $0x70] sm:$0xff] %vm368, 0.0
      %384 = vst.msk [vmem:[#allocation2 + $0x78] sm:$0xff] %vm368, 0.0
      %385 = vst.msk [vmem:[#allocation2 + $0x80] sm:$0xff] %vm368, 0.0
      %386 = vst.msk [vmem:[#allocation2 + $0x88] sm:$0xff] %vm368, 0.0
      %387 = vst.msk [vmem:[#allocation2 + $0x90] sm:$0xff] %vm368, 0.0
      %388 = vst.msk [vmem:[#allocation2 + $0x98] sm:$0xff] %vm368, 0.0
      %389 = vst.msk [vmem:[#allocation2 + $0xa0] sm:$0xff] %vm368, 0.0
      %390 = vst.msk [vmem:[#allocation2 + $0xa8] sm:$0xff] %vm368, 0.0
      %391 = vst.msk [vmem:[#allocation2 + $0xb0] sm:$0xff] %vm368, 0.0
      %392 = vst.msk [vmem:[#allocation2 + $0xb8] sm:$0xff] %vm368, 0.0
      %393 = vst.msk [vmem:[#allocation2 + $0xc0] sm:$0xff] %vm368, 0.0
      %394 = vst.msk [vmem:[#allocation2 + $0xc8] sm:$0xff] %vm368, 0.0
      %395 = vst.msk [vmem:[#allocation2 + $0xd0] sm:$0xff] %vm368, 0.0
      %396 = vst.msk [vmem:[#allocation2 + $0xd8] sm:$0xff] %vm368, 0.0
      %397 = vst.msk [vmem:[#allocation2 + $0xe0] sm:$0xff] %vm368, 0.0
      %398 = vst.msk [vmem:[#allocation2 + $0xe8] sm:$0xff] %vm368, 0.0
      %399 = vst.msk [vmem:[#allocation2 + $0xf0] sm:$0xff] %vm368, 0.0
      %400 = vst.msk [vmem:[#allocation2 + $0xf8] sm:$0xff] %vm368, 0.0
      %401 = vst.msk [vmem:[#allocation2 + $0x100] sm:$0xff] %vm368, 0.0
      %402 = vst.msk [vmem:[#allocation2 + $0x108] sm:$0xff] %vm368, 0.0
      %403 = vst.msk [vmem:[#allocation2 + $0x110] sm:$0xff] %vm368, 0.0
      %404 = vst.msk [vmem:[#allocation2 + $0x118] sm:$0xff] %vm368, 0.0
      %405 = vst.msk [vmem:[#allocation2 + $0x120] sm:$0xff] %vm368, 0.0
      %406 = vst.msk [vmem:[#allocation2 + $0x128] sm:$0xff] %vm368, 0.0
      %407 = vst.msk [vmem:[#allocation2 + $0x130] sm:$0xff] %vm368, 0.0
      %408 = vst.msk [vmem:[#allocation2 + $0x138] sm:$0xff] %vm368, 0.0
      %409 = vst.msk [vmem:[#allocation2 + $0x140] sm:$0xff] %vm368, 0.0
      %410 = vst.msk [vmem:[#allocation2 + $0x148] sm:$0xff] %vm368, 0.0
      %411 = vst.msk [vmem:[#allocation2 + $0x150] sm:$0xff] %vm368, 0.0
      %412 = vst.msk [vmem:[#allocation2 + $0x158] sm:$0xff] %vm368, 0.0
      %413 = vst.msk [vmem:[#allocation2 + $0x160] sm:$0xff] %vm368, 0.0
      %414 = vst.msk [vmem:[#allocation2 + $0x168] sm:$0xff] %vm368, 0.0
      %415 = vst.msk [vmem:[#allocation2 + $0x170] sm:$0xff] %vm368, 0.0
      %416 = vst.msk [vmem:[#allocation2 + $0x178] sm:$0xff] %vm368, 0.0
      %417 = vst.msk [vmem:[#allocation2 + $0x180] sm:$0xff] %vm368, 0.0
      %418 = vst.msk [vmem:[#allocation2 + $0x188] sm:$0xff] %vm368, 0.0
      %419 = vst.msk [vmem:[#allocation2 + $0x190] sm:$0xff] %vm368, 0.0
      %420 = vst.msk [vmem:[#allocation2 + $0x198] sm:$0xff] %vm368, 0.0
      %421 = vst.msk [vmem:[#allocation2 + $0x1a0] sm:$0xff] %vm368, 0.0
      %422 = vst.msk [vmem:[#allocation2 + $0x1a8] sm:$0xff] %vm368, 0.0
      %423 = vst.msk [vmem:[#allocation2 + $0x1b0] sm:$0xff] %vm368, 0.0
      %424 = vst.msk [vmem:[#allocation2 + $0x1b8] sm:$0xff] %vm368, 0.0
      %425 = vst.msk [vmem:[#allocation2 + $0x1c0] sm:$0xff] %vm368, 0.0
      %426 = vst.msk [vmem:[#allocation2 + $0x1c8] sm:$0xff] %vm368, 0.0
      %427 = vst.msk [vmem:[#allocation2 + $0x1d0] sm:$0xff] %vm368, 0.0
      %428 = vst.msk [vmem:[#allocation2 + $0x1d8] sm:$0xff] %vm368, 0.0
      %429 = vst.msk [vmem:[#allocation2 + $0x1e0] sm:$0xff] %vm368, 0.0
      %430 = vst.msk [vmem:[#allocation2 + $0x1e8] sm:$0xff] %vm368, 0.0
      %431 = vst.msk [vmem:[#allocation2 + $0x1f0] sm:$0xff] %vm368, 0.0
      %432 = vst.msk [vmem:[#allocation2 + $0x1f8] sm:$0xff] %vm368, 0.0
      %433 = vst.msk [vmem:[#allocation2 + $0x200] sm:$0xff] %vm368, 0.0
      %434 = vst.msk [vmem:[#allocation2 + $0x208] sm:$0xff] %vm368, 0.0
      %435 = vst.msk [vmem:[#allocation2 + $0x210] sm:$0xff] %vm368, 0.0
      %436 = vst.msk [vmem:[#allocation2 + $0x218] sm:$0xff] %vm368, 0.0
      %437 = vst.msk [vmem:[#allocation2 + $0x220] sm:$0xff] %vm368, 0.0
      %438 = vst.msk [vmem:[#allocation2 + $0x228] sm:$0xff] %vm368, 0.0
      %439 = vst.msk [vmem:[#allocation2 + $0x230] sm:$0xff] %vm368, 0.0
      %440 = vst.msk [vmem:[#allocation2 + $0x238] sm:$0xff] %vm368, 0.0
      %441 = vst.msk [vmem:[#allocation2 + $0x240] sm:$0xff] %vm368, 0.0
      %442 = vst.msk [vmem:[#allocation2 + $0x248] sm:$0xff] %vm368, 0.0
      %443 = vst.msk [vmem:[#allocation2 + $0x250] sm:$0xff] %vm368, 0.0
      %444 = vst.msk [vmem:[#allocation2 + $0x258] sm:$0xff] %vm368, 0.0
      %445 = vst.msk [vmem:[#allocation2 + $0x260] sm:$0xff] %vm368, 0.0
      %446 = vst.msk [vmem:[#allocation2 + $0x268] sm:$0xff] %vm368, 0.0
      %447 = vst.msk [vmem:[#allocation2 + $0x270] sm:$0xff] %vm368, 0.0
      %448 = vst.msk [vmem:[#allocation2 + $0x278] sm:$0xff] %vm368, 0.0
      %449 = vst.msk [vmem:[#allocation2 + $0x280] sm:$0xff] %vm368, 0.0
      %450 = vst.msk [vmem:[#allocation2 + $0x288] sm:$0xff] %vm368, 0.0
      %451 = vst.msk [vmem:[#allocation2 + $0x290] sm:$0xff] %vm368, 0.0
      %452 = vst.msk [vmem:[#allocation2 + $0x298] sm:$0xff] %vm368, 0.0
      %453 = vst.msk [vmem:[#allocation2 + $0x2a0] sm:$0xff] %vm368, 0.0
      %454 = vst.msk [vmem:[#allocation2 + $0x2a8] sm:$0xff] %vm368, 0.0
      %455 = vst.msk [vmem:[#allocation2 + $0x2b0] sm:$0xff] %vm368, 0.0
      %456 = vst.msk [vmem:[#allocation2 + $0x2b8] sm:$0xff] %vm368, 0.0
      %457 = vst.msk [vmem:[#allocation2 + $0x2c0] sm:$0xff] %vm368, 0.0
      %458 = vst.msk [vmem:[#allocation2 + $0x2c8] sm:$0xff] %vm368, 0.0
      %459 = vst.msk [vmem:[#allocation2 + $0x2d0] sm:$0xff] %vm368, 0.0
      %460 = vst.msk [vmem:[#allocation2 + $0x2d8] sm:$0xff] %vm368, 0.0
      %461 = vst.msk [vmem:[#allocation2 + $0x2e0] sm:$0xff] %vm368, 0.0
      %462 = vst.msk [vmem:[#allocation2 + $0x2e8] sm:$0xff] %vm368, 0.0
      %463 = vst.msk [vmem:[#allocation2 + $0x2f0] sm:$0xff] %vm368, 0.0
      %464 = vst.msk [vmem:[#allocation2 + $0x2f8] sm:$0xff] %vm368, 0.0
      %465 = vst.msk [vmem:[#allocation2 + $0x300] sm:$0xff] %vm368, 0.0
      %466 = vst.msk [vmem:[#allocation2 + $0x308] sm:$0xff] %vm368, 0.0
      %467 = vst.msk [vmem:[#allocation2 + $0x310] sm:$0xff] %vm368, 0.0
      %468 = vst.msk [vmem:[#allocation2 + $0x318] sm:$0xff] %vm368, 0.0
      %469 = vst.msk [vmem:[#allocation2 + $0x320] sm:$0xff] %vm368, 0.0
      %470 = vst.msk [vmem:[#allocation2 + $0x328] sm:$0xff] %vm368, 0.0
      %471 = vst.msk [vmem:[#allocation2 + $0x330] sm:$0xff] %vm368, 0.0
      %472 = vst.msk [vmem:[#allocation2 + $0x338] sm:$0xff] %vm368, 0.0
      %473 = vst.msk [vmem:[#allocation2 + $0x340] sm:$0xff] %vm368, 0.0
      %474 = vst.msk [vmem:[#allocation2 + $0x348] sm:$0xff] %vm368, 0.0
      %475 = vst.msk [vmem:[#allocation2 + $0x350] sm:$0xff] %vm368, 0.0
      %476 = vst.msk [vmem:[#allocation2 + $0x358] sm:$0xff] %vm368, 0.0
      %477 = vst.msk [vmem:[#allocation2 + $0x360] sm:$0xff] %vm368, 0.0
      %478 = vst.msk [vmem:[#allocation2 + $0x368] sm:$0xff] %vm368, 0.0
      %479 = vst.msk [vmem:[#allocation2 + $0x370] sm:$0xff] %vm368, 0.0
      %480 = vst.msk [vmem:[#allocation2 + $0x378] sm:$0xff] %vm368, 0.0
      %481 = vst.msk [vmem:[#allocation2 + $0x380] sm:$0xff] %vm368, 0.0
      %482 = vst.msk [vmem:[#allocation2 + $0x388] sm:$0xff] %vm368, 0.0
      %483 = vst.msk [vmem:[#allocation2 + $0x390] sm:$0xff] %vm368, 0.0
      %484 = vst.msk [vmem:[#allocation2 + $0x398] sm:$0xff] %vm368, 0.0
      %485 = vst.msk [vmem:[#allocation2 + $0x3a0] sm:$0xff] %vm368, 0.0
      %486 = vst.msk [vmem:[#allocation2 + $0x3a8] sm:$0xff] %vm368, 0.0
      %487 = vst.msk [vmem:[#allocation2 + $0x3b0] sm:$0xff] %vm368, 0.0
      %488 = vst.msk [vmem:[#allocation2 + $0x3b8] sm:$0xff] %vm368, 0.0
      %489 = vst.msk [vmem:[#allocation2 + $0x3c0] sm:$0xff] %vm368, 0.0
      %490 = vst.msk [vmem:[#allocation2 + $0x3c8] sm:$0xff] %vm368, 0.0
      %491 = vst.msk [vmem:[#allocation2 + $0x3d0] sm:$0xff] %vm368, 0.0
      %492 = vst.msk [vmem:[#allocation2 + $0x3d8] sm:$0xff] %vm368, 0.0
      %493 = vst.msk [vmem:[#allocation2 + $0x3e0] sm:$0xff] %vm368, 0.0
      %494 = vst.msk [vmem:[#allocation2 + $0x3e8] sm:$0xff] %vm368, 0.0
      %495 = vst.msk [vmem:[#allocation2 + $0x3f0] sm:$0xff] %vm368, 0.0
      %496 = vst.msk [vmem:[#allocation2 + $0x3f8] sm:$0xff] %vm368, 0.0
      %497 = vst.msk [vmem:[#allocation2 + $0x400] sm:$0xff] %vm368, 0.0
      %498 = vst.msk [vmem:[#allocation2 + $0x408] sm:$0xff] %vm368, 0.0
      %499 = vst.msk [vmem:[#allocation2 + $0x410] sm:$0xff] %vm368, 0.0
      %500 = vst.msk [vmem:[#allocation2 + $0x418] sm:$0xff] %vm368, 0.0
      %501 = vst.msk [vmem:[#allocation2 + $0x420] sm:$0xff] %vm368, 0.0
      %502 = vst.msk [vmem:[#allocation2 + $0x428] sm:$0xff] %vm368, 0.0
      %503 = vst.msk [vmem:[#allocation2 + $0x430] sm:$0xff] %vm368, 0.0
      %504 = vst.msk [vmem:[#allocation2 + $0x438] sm:$0xff] %vm368, 0.0
      %505 = vst.msk [vmem:[#allocation2 + $0x440] sm:$0xff] %vm368, 0.0
      %506 = vst.msk [vmem:[#allocation2 + $0x448] sm:$0xff] %vm368, 0.0
      %507 = vst.msk [vmem:[#allocation2 + $0x450] sm:$0xff] %vm368, 0.0
      %508 = vst.msk [vmem:[#allocation2 + $0x458] sm:$0xff] %vm368, 0.0
      %509 = vst.msk [vmem:[#allocation2 + $0x460] sm:$0xff] %vm368, 0.0
      %510 = vst.msk [vmem:[#allocation2 + $0x468] sm:$0xff] %vm368, 0.0
      %511 = vst.msk [vmem:[#allocation2 + $0x470] sm:$0xff] %vm368, 0.0
      %512 = vst.msk [vmem:[#allocation2 + $0x478] sm:$0xff] %vm368, 0.0
      %513 = vst.msk [vmem:[#allocation2 + $0x480] sm:$0xff] %vm368, 0.0
      %514 = vst.msk [vmem:[#allocation2 + $0x488] sm:$0xff] %vm368, 0.0
      %515 = vst.msk [vmem:[#allocation2 + $0x490] sm:$0xff] %vm368, 0.0
      %516 = vst.msk [vmem:[#allocation2 + $0x498] sm:$0xff] %vm368, 0.0
      %517 = vst.msk [vmem:[#allocation2 + $0x4a0] sm:$0xff] %vm368, 0.0
      %518 = vst.msk [vmem:[#allocation2 + $0x4a8] sm:$0xff] %vm368, 0.0
      %519 = vst.msk [vmem:[#allocation2 + $0x4b0] sm:$0xff] %vm368, 0.0
      %520 = vst.msk [vmem:[#allocation2 + $0x4b8] sm:$0xff] %vm368, 0.0
      %521 = vst.msk [vmem:[#allocation2 + $0x4c0] sm:$0xff] %vm368, 0.0
      %522 = vst.msk [vmem:[#allocation2 + $0x4c8] sm:$0xff] %vm368, 0.0
      %523 = vst.msk [vmem:[#allocation2 + $0x4d0] sm:$0xff] %vm368, 0.0
      %524 = vst.msk [vmem:[#allocation2 + $0x4d8] sm:$0xff] %vm368, 0.0
      %525 = vst.msk [vmem:[#allocation2 + $0x4e0] sm:$0xff] %vm368, 0.0
      %526 = vst.msk [vmem:[#allocation2 + $0x4e8] sm:$0xff] %vm368, 0.0
      %527 = vst.msk [vmem:[#allocation2 + $0x4f0] sm:$0xff] %vm368, 0.0
      %528 = vst.msk [vmem:[#allocation2 + $0x4f8] sm:$0xff] %vm368, 0.0
      %529 = vst.msk [vmem:[#allocation2 + $0x500] sm:$0xff] %vm368, 0.0
      %530 = vst.msk [vmem:[#allocation2 + $0x508] sm:$0xff] %vm368, 0.0
      %531 = vst.msk [vmem:[#allocation2 + $0x510] sm:$0xff] %vm368, 0.0
      %532 = vst.msk [vmem:[#allocation2 + $0x518] sm:$0xff] %vm368, 0.0
      %533 = vst.msk [vmem:[#allocation2 + $0x520] sm:$0xff] %vm368, 0.0
      %534 = vst.msk [vmem:[#allocation2 + $0x528] sm:$0xff] %vm368, 0.0
      %535 = vst.msk [vmem:[#allocation2 + $0x530] sm:$0xff] %vm368, 0.0
      %536 = vst.msk [vmem:[#allocation2 + $0x538] sm:$0xff] %vm368, 0.0
      %537 = vst.msk [vmem:[#allocation2 + $0x540] sm:$0xff] %vm368, 0.0
      %538 = vst.msk [vmem:[#allocation2 + $0x548] sm:$0xff] %vm368, 0.0
      %539 = vst.msk [vmem:[#allocation2 + $0x550] sm:$0xff] %vm368, 0.0
      %540 = vst.msk [vmem:[#allocation2 + $0x558] sm:$0xff] %vm368, 0.0
      %541 = vst.msk [vmem:[#allocation2 + $0x560] sm:$0xff] %vm368, 0.0
      %542 = vst.msk [vmem:[#allocation2 + $0x568] sm:$0xff] %vm368, 0.0
      %543 = vst.msk [vmem:[#allocation2 + $0x570] sm:$0xff] %vm368, 0.0
      %544 = vst.msk [vmem:[#allocation2 + $0x578] sm:$0xff] %vm368, 0.0
      %545 = vst.msk [vmem:[#allocation2 + $0x580] sm:$0xff] %vm368, 0.0
      %546 = vst.msk [vmem:[#allocation2 + $0x588] sm:$0xff] %vm368, 0.0
      %547 = vst.msk [vmem:[#allocation2 + $0x590] sm:$0xff] %vm368, 0.0
      %548 = vst.msk [vmem:[#allocation2 + $0x598] sm:$0xff] %vm368, 0.0
      %s549 = scalar_lea.vmem [#allocation2], 48
      %550 = vst.msk [vmem:[%s549 + $0x2] sm:$0xff] %vm368, %v336
      %551 = vst.msk [vmem:[%s549 + $0xa] sm:$0xff] %vm368, %v337
      %552 = vst.msk [vmem:[%s549 + $0x1a] sm:$0xff] %vm368, %v338
      %553 = vst.msk [vmem:[%s549 + $0x22] sm:$0xff] %vm368, %v339
      %554 = vst.msk [vmem:[%s549 + $0x32] sm:$0xff] %vm368, %v340
      %555 = vst.msk [vmem:[%s549 + $0x3a] sm:$0xff] %vm368, %v341
      %556 = vst.msk [vmem:[%s549 + $0x4a] sm:$0xff] %vm368, %v342
      %557 = vst.msk [vmem:[%s549 + $0x52] sm:$0xff] %vm368, %v343
      %558 = vst.msk [vmem:[%s549 + $0x62] sm:$0xff] %vm368, %v344
      %559 = vst.msk [vmem:[%s549 + $0x6a] sm:$0xff] %vm368, %v345
      %560 = vst.msk [vmem:[%s549 + $0x7a] sm:$0xff] %vm368, %v346
      %561 = vst.msk [vmem:[%s549 + $0x82] sm:$0xff] %vm368, %v347
      %562 = vst.msk [vmem:[%s549 + $0x92] sm:$0xff] %vm368, %v348
      %563 = vst.msk [vmem:[%s549 + $0x9a] sm:$0xff] %vm368, %v349
      %564 = vst.msk [vmem:[%s549 + $0xaa] sm:$0xff] %vm368, %v350
      %565 = vst.msk [vmem:[%s549 + $0xb2] sm:$0xff] %vm368, %v351
      %566 = vst.msk [vmem:[%s549 + $0xc2] sm:$0xff] %vm368, %v352
      %567 = vst.msk [vmem:[%s549 + $0xca] sm:$0xff] %vm368, %v353
      %568 = vst.msk [vmem:[%s549 + $0xda] sm:$0xff] %vm368, %v354
      %569 = vst.msk [vmem:[%s549 + $0xe2] sm:$0xff] %vm368, %v355
      %570 = vst.msk [vmem:[%s549 + $0xf2] sm:$0xff] %vm368, %v356
      %571 = vst.msk [vmem:[%s549 + $0xfa] sm:$0xff] %vm368, %v357
      %572 = vst.msk [vmem:[%s549 + $0x10a] sm:$0xff] %vm368, %v358
      %573 = vst.msk [vmem:[%s549 + $0x112] sm:$0xff] %vm368, %v359
      %574 = vst.msk [vmem:[%s549 + $0x122] sm:$0xff] %vm368, %v360
      %575 = vst.msk [vmem:[%s549 + $0x12a] sm:$0xff] %vm368, %v361
      %576 = vst.msk [vmem:[%s549 + $0x13a] sm:$0xff] %vm368, %v362
      %577 = vst.msk [vmem:[%s549 + $0x142] sm:$0xff] %vm368, %v363
      %578 = vst.msk [vmem:[%s549 + $0x152] sm:$0xff] %vm368, %v364
      %579 = vst.msk [vmem:[%s549 + $0x15a] sm:$0xff] %vm368, %v365
      %580 = vst.msk [vmem:[%s549 + $0x16a] sm:$0xff] %vm368, %v366
      %581 = vst.msk [vmem:[%s549 + $0x172] sm:$0xff] %vm368, %v367
      %s582 = scalar_lea.vmem [#allocation2], 528
      %583 = vst.msk [vmem:[%s582] sm:$0xff] %vm368, %v336
      %584 = vst.msk [vmem:[%s582 + $0x8] sm:$0xff] %vm368, %v337
      %585 = vst.msk [vmem:[%s582 + $0x18] sm:$0xff] %vm368, %v338
      %586 = vst.msk [vmem:[%s582 + $0x20] sm:$0xff] %vm368, %v339
      %587 = vst.msk [vmem:[%s582 + $0x30] sm:$0xff] %vm368, %v340
      %588 = vst.msk [vmem:[%s582 + $0x38] sm:$0xff] %vm368, %v341
      %589 = vst.msk [vmem:[%s582 + $0x48] sm:$0xff] %vm368, %v342
      %590 = vst.msk [vmem:[%s582 + $0x50] sm:$0xff] %vm368, %v343
      %591 = vst.msk [vmem:[%s582 + $0x60] sm:$0xff] %vm368, %v344
      %592 = vst.msk [vmem:[%s582 + $0x68] sm:$0xff] %vm368, %v345
      %593 = vst.msk [vmem:[%s582 + $0x78] sm:$0xff] %vm368, %v346
      %594 = vst.msk [vmem:[%s582 + $0x80] sm:$0xff] %vm368, %v347
      %595 = vst.msk [vmem:[%s582 + $0x90] sm:$0xff] %vm368, %v348
      %596 = vst.msk [vmem:[%s582 + $0x98] sm:$0xff] %vm368, %v349
      %597 = vst.msk [vmem:[%s582 + $0xa8] sm:$0xff] %vm368, %v350
      %598 = vst.msk [vmem:[%s582 + $0xb0] sm:$0xff] %vm368, %v351
      %599 = vst.msk [vmem:[%s582 + $0xc0] sm:$0xff] %vm368, %v352
      %600 = vst.msk [vmem:[%s582 + $0xc8] sm:$0xff] %vm368, %v353
      %601 = vst.msk [vmem:[%s582 + $0xd8] sm:$0xff] %vm368, %v354
      %602 = vst.msk [vmem:[%s582 + $0xe0] sm:$0xff] %vm368, %v355
      %603 = vst.msk [vmem:[%s582 + $0xf0] sm:$0xff] %vm368, %v356
      %604 = vst.msk [vmem:[%s582 + $0xf8] sm:$0xff] %vm368, %v357
      %605 = vst.msk [vmem:[%s582 + $0x108] sm:$0xff] %vm368, %v358
      %606 = vst.msk [vmem:[%s582 + $0x110] sm:$0xff] %vm368, %v359
      %607 = vst.msk [vmem:[%s582 + $0x120] sm:$0xff] %vm368, %v360
      %608 = vst.msk [vmem:[%s582 + $0x128] sm:$0xff] %vm368, %v361
      %609 = vst.msk [vmem:[%s582 + $0x138] sm:$0xff] %vm368, %v362
      %610 = vst.msk [vmem:[%s582 + $0x140] sm:$0xff] %vm368, %v363
      %611 = vst.msk [vmem:[%s582 + $0x150] sm:$0xff] %vm368, %v364
      %612 = vst.msk [vmem:[%s582 + $0x158] sm:$0xff] %vm368, %v365
      %613 = vst.msk [vmem:[%s582 + $0x168] sm:$0xff] %vm368, %v366
      %614 = vst.msk [vmem:[%s582 + $0x170] sm:$0xff] %vm368, %v367
      %s615 = scalar_lea.vmem [#allocation2], 1008
      %vm616 = vcmask 31746
      %617 = vst.msk [vmem:[%s615 - $0x2] sm:$0xfc] %vm616, %v336
      %618 = vst.msk [vmem:[%s615 + $0x6] sm:$0xff] %vm368, %v337
      %619 = vst.msk [vmem:[%s615 + $0x16] sm:$0xfc] %vm616, %v338
      %620 = vst.msk [vmem:[%s615 + $0x1e] sm:$0xff] %vm368, %v339
      %621 = vst.msk [vmem:[%s615 + $0x2e] sm:$0xfc] %vm616, %v340
      %622 = vst.msk [vmem:[%s615 + $0x36] sm:$0xff] %vm368, %v341
      %623 = vst.msk [vmem:[%s615 + $0x46] sm:$0xfc] %vm616, %v342
      %624 = vst.msk [vmem:[%s615 + $0x4e] sm:$0xff] %vm368, %v343
      %625 = vst.msk [vmem:[%s615 + $0x5e] sm:$0xfc] %vm616, %v344
      %626 = vst.msk [vmem:[%s615 + $0x66] sm:$0xff] %vm368, %v345
      %627 = vst.msk [vmem:[%s615 + $0x76] sm:$0xfc] %vm616, %v346
      %628 = vst.msk [vmem:[%s615 + $0x7e] sm:$0xff] %vm368, %v347
      %629 = vst.msk [vmem:[%s615 + $0x8e] sm:$0xfc] %vm616, %v348
      %630 = vst.msk [vmem:[%s615 + $0x96] sm:$0xff] %vm368, %v349
      %631 = vst.msk [vmem:[%s615 + $0xa6] sm:$0xfc] %vm616, %v350
      %632 = vst.msk [vmem:[%s615 + $0xae] sm:$0xff] %vm368, %v351
      %633 = vst.msk [vmem:[%s615 + $0xbe] sm:$0xfc] %vm616, %v352
      %634 = vst.msk [vmem:[%s615 + $0xc6] sm:$0xff] %vm368, %v353
      %635 = vst.msk [vmem:[%s615 + $0xd6] sm:$0xfc] %vm616, %v354
      %636 = vst.msk [vmem:[%s615 + $0xde] sm:$0xff] %vm368, %v355
      %637 = vst.msk [vmem:[%s615 + $0xee] sm:$0xfc] %vm616, %v356
      %638 = vst.msk [vmem:[%s615 + $0xf6] sm:$0xff] %vm368, %v357
      %639 = vst.msk [vmem:[%s615 + $0x106] sm:$0xfc] %vm616, %v358
      %640 = vst.msk [vmem:[%s615 + $0x10e] sm:$0xff] %vm368, %v359
      %641 = vst.msk [vmem:[%s615 + $0x11e] sm:$0xfc] %vm616, %v360
      %642 = vst.msk [vmem:[%s615 + $0x126] sm:$0xff] %vm368, %v361
      %643 = vst.msk [vmem:[%s615 + $0x136] sm:$0xfc] %vm616, %v362
      %644 = vst.msk [vmem:[%s615 + $0x13e] sm:$0xff] %vm368, %v363
      %645 = vst.msk [vmem:[%s615 + $0x14e] sm:$0xfc] %vm616, %v364
      %646 = vst.msk [vmem:[%s615 + $0x156] sm:$0xff] %vm368, %v365
      %647 = vst.msk [vmem:[%s615 + $0x166] sm:$0xfc] %vm616, %v366
      %648 = vst.msk [vmem:[%s615 + $0x16e] sm:$0xff] %vm368, %v367
      %v649 = vld [vmem:[%s3] sm:$0xff]
      %v650 = vld [vmem:[%s3 + $0x8] sm:$0x1]
      %v651 = vld [vmem:[%s4] sm:$0x3]
      %v652 = vld [vmem:[#allocation2] sm:$0xff]
      %v653 = vld [vmem:[#allocation2 + $0x8] sm:$0xff]
      %v654 = vld [vmem:[#allocation2 + $0x18] sm:$0xff]
      %v655 = vld [vmem:[#allocation2 + $0x20] sm:$0xff]
      %v656 = vld [vmem:[#allocation2 + $0x30] sm:$0xff]
      %v657 = vld [vmem:[#allocation2 + $0x38] sm:$0xff]
      %v658 = vld [vmem:[#allocation2 + $0x48] sm:$0xff]
      %v659 = vld [vmem:[#allocation2 + $0x50] sm:$0xff]
      %v660 = vld [vmem:[#allocation2 + $0x60] sm:$0xff]
      %v661 = vld [vmem:[#allocation2 + $0x68] sm:$0xff]
      %v662 = vld [vmem:[#allocation2 + $0x78] sm:$0xff]
      %v663 = vld [vmem:[#allocation2 + $0x80] sm:$0xff]
      %v664 = vld [vmem:[#allocation2 + $0x90] sm:$0xff]
      %v665 = vld [vmem:[#allocation2 + $0x98] sm:$0xff]
      %v666 = vld [vmem:[#allocation2 + $0xa8] sm:$0xff]
      %v667 = vld [vmem:[#allocation2 + $0xb0] sm:$0xff]
      %v668 = vlaneseq
      %v669 = vshrl.u32 %v668, 7
      %v670 = vsub.s32 0, %v669
      %v671 = vrot.slane %v649, %v670
      %v672 = vmul.f32 %v652, %v671
      %v673 = vmul.f32 %v653, %v671
      %v674 = vmul.f32 %v654, %v671
      %v675 = vmul.f32 %v655, %v671
      %v676 = vmul.f32 %v656, %v671
      %v677 = vmul.f32 %v657, %v671
      %v678 = vmul.f32 %v658, %v671
      %v679 = vmul.f32 %v659, %v671
      %v680 = vmul.f32 %v660, %v671
      %v681 = vmul.f32 %v661, %v671
      %v682 = vmul.f32 %v662, %v671
      %v683 = vmul.f32 %v663, %v671
      %v684 = vmul.f32 %v664, %v671
      %v685 = vmul.f32 %v665, %v671
      %v686 = vmul.f32 %v666, %v671
      %v687 = vmul.f32 %v667, %v671
      %v688 = vadd.f32 %v672, 0.0
      %v689 = vadd.f32 %v673, 0.0
      %v690 = vadd.f32 %v674, 0.0
      %v691 = vadd.f32 %v675, 0.0
      %v692 = vadd.f32 %v676, 0.0
      %v693 = vadd.f32 %v677, 0.0
      %v694 = vadd.f32 %v678, 0.0
      %v695 = vadd.f32 %v679, 0.0
      %v696 = vadd.f32 %v680, 0.0
      %v697 = vadd.f32 %v681, 0.0
      %v698 = vadd.f32 %v682, 0.0
      %v699 = vadd.f32 %v683, 0.0
      %v700 = vadd.f32 %v684, 0.0
      %v701 = vadd.f32 %v685, 0.0
      %v702 = vadd.f32 %v686, 0.0
      %v703 = vadd.f32 %v687, 0.0
      %s704 = scalar_lea.vmem [#allocation2], 480
      %v705 = vld [vmem:[%s704] sm:$0xff]
      %v706 = vld [vmem:[%s704 + $0x8] sm:$0xff]
      %v707 = vld [vmem:[%s704 + $0x18] sm:$0xff]
      %v708 = vld [vmem:[%s704 + $0x20] sm:$0xff]
      %v709 = vld [vmem:[%s704 + $0x30] sm:$0xff]
      %v710 = vld [vmem:[%s704 + $0x38] sm:$0xff]
      %v711 = vld [vmem:[%s704 + $0x48] sm:$0xff]
      %v712 = vld [vmem:[%s704 + $0x50] sm:$0xff]
      %v713 = vld [vmem:[%s704 + $0x60] sm:$0xff]
      %v714 = vld [vmem:[%s704 + $0x68] sm:$0xff]
      %v715 = vld [vmem:[%s704 + $0x78] sm:$0xff]
      %v716 = vld [vmem:[%s704 + $0x80] sm:$0xff]
      %v717 = vld [vmem:[%s704 + $0x90] sm:$0xff]
      %v718 = vld [vmem:[%s704 + $0x98] sm:$0xff]
      %v719 = vld [vmem:[%s704 + $0xa8] sm:$0xff]
      %v720 = vld [vmem:[%s704 + $0xb0] sm:$0xff]
      %v721 = vlaneseq
      %v722 = vshrl.u32 %v721, 7
      %v723 = vsub.s32 1, %v722
      %v724 = vrot.slane %v649, %v723
      %v725 = vmul.f32 %v705, %v724
      %v726 = vmul.f32 %v706, %v724
      %v727 = vmul.f32 %v707, %v724
      %v728 = vmul.f32 %v708, %v724
      %v729 = vmul.f32 %v709, %v724
      %v730 = vmul.f32 %v710, %v724
      %v731 = vmul.f32 %v711, %v724
      %v732 = vmul.f32 %v712, %v724
      %v733 = vmul.f32 %v713, %v724
      %v734 = vmul.f32 %v714, %v724
      %v735 = vmul.f32 %v715, %v724
      %v736 = vmul.f32 %v716, %v724
      %v737 = vmul.f32 %v717, %v724
      %v738 = vmul.f32 %v718, %v724
      %v739 = vmul.f32 %v719, %v724
      %v740 = vmul.f32 %v720, %v724
      %v741 = vadd.f32 %v688, %v725
      %v742 = vadd.f32 %v689, %v726
      %v743 = vadd.f32 %v690, %v727
      %v744 = vadd.f32 %v691, %v728
      %v745 = vadd.f32 %v692, %v729
      %v746 = vadd.f32 %v693, %v730
      %v747 = vadd.f32 %v694, %v731
      %v748 = vadd.f32 %v695, %v732
      %v749 = vadd.f32 %v696, %v733
      %v750 = vadd.f32 %v697, %v734
      %v751 = vadd.f32 %v698, %v735
      %v752 = vadd.f32 %v699, %v736
      %v753 = vadd.f32 %v700, %v737
      %v754 = vadd.f32 %v701, %v738
      %v755 = vadd.f32 %v702, %v739
      %v756 = vadd.f32 %v703, %v740
      %s757 = scalar_lea.vmem [#allocation2], 960
      %v758 = vld [vmem:[%s757] sm:$0xff]
      %v759 = vld [vmem:[%s757 + $0x8] sm:$0xff]
      %v760 = vld [vmem:[%s757 + $0x18] sm:$0xff]
      %v761 = vld [vmem:[%s757 + $0x20] sm:$0xff]
      %v762 = vld [vmem:[%s757 + $0x30] sm:$0xff]
      %v763 = vld [vmem:[%s757 + $0x38] sm:$0xff]
      %v764 = vld [vmem:[%s757 + $0x48] sm:$0xff]
      %v765 = vld [vmem:[%s757 + $0x50] sm:$0xff]
      %v766 = vld [vmem:[%s757 + $0x60] sm:$0xff]
      %v767 = vld [vmem:[%s757 + $0x68] sm:$0xff]
      %v768 = vld [vmem:[%s757 + $0x78] sm:$0xff]
      %v769 = vld [vmem:[%s757 + $0x80] sm:$0xff]
      %v770 = vld [vmem:[%s757 + $0x90] sm:$0xff]
      %v771 = vld [vmem:[%s757 + $0x98] sm:$0xff]
      %v772 = vld [vmem:[%s757 + $0xa8] sm:$0xff]
      %v773 = vld [vmem:[%s757 + $0xb0] sm:$0xff]
      %v774 = vlaneseq
      %v775 = vshrl.u32 %v774, 7
      %v776 = vsub.s32 2, %v775
      %v777 = vrot.slane %v649, %v776
      %v778 = vmul.f32 %v758, %v777
      %v779 = vmul.f32 %v759, %v777
      %v780 = vmul.f32 %v760, %v777
      %v781 = vmul.f32 %v761, %v777
      %v782 = vmul.f32 %v762, %v777
      %v783 = vmul.f32 %v763, %v777
      %v784 = vmul.f32 %v764, %v777
      %v785 = vmul.f32 %v765, %v777
      %v786 = vmul.f32 %v766, %v777
      %v787 = vmul.f32 %v767, %v777
      %v788 = vmul.f32 %v768, %v777
      %v789 = vmul.f32 %v769, %v777
      %v790 = vmul.f32 %v770, %v777
      %v791 = vmul.f32 %v771, %v777
      %v792 = vmul.f32 %v772, %v777
      %v793 = vmul.f32 %v773, %v777
      %v794 = vadd.f32 %v741, %v778
      %v795 = vadd.f32 %v742, %v779
      %v796 = vadd.f32 %v743, %v780
      %v797 = vadd.f32 %v744, %v781
      %v798 = vadd.f32 %v745, %v782
      %v799 = vadd.f32 %v746, %v783
      %v800 = vadd.f32 %v747, %v784
      %v801 = vadd.f32 %v748, %v785
      %v802 = vadd.f32 %v749, %v786
      %v803 = vadd.f32 %v750, %v787
      %v804 = vadd.f32 %v751, %v788
      %v805 = vadd.f32 %v752, %v789
      %v806 = vadd.f32 %v753, %v790
      %v807 = vadd.f32 %v754, %v791
      %v808 = vadd.f32 %v755, %v792
      %v809 = vadd.f32 %v756, %v793
      %v810 = vld [vmem:[%s549] sm:$0xff]
      %v811 = vld [vmem:[%s549 + $0x8] sm:$0xff]
      %v812 = vld [vmem:[%s549 + $0x18] sm:$0xff]
      %v813 = vld [vmem:[%s549 + $0x20] sm:$0xff]
      %v814 = vld [vmem:[%s549 + $0x30] sm:$0xff]
      %v815 = vld [vmem:[%s549 + $0x38] sm:$0xff]
      %v816 = vld [vmem:[%s549 + $0x48] sm:$0xff]
      %v817 = vld [vmem:[%s549 + $0x50] sm:$0xff]
      %v818 = vld [vmem:[%s549 + $0x60] sm:$0xff]
      %v819 = vld [vmem:[%s549 + $0x68] sm:$0xff]
      %v820 = vld [vmem:[%s549 + $0x78] sm:$0xff]
      %v821 = vld [vmem:[%s549 + $0x80] sm:$0xff]
      %v822 = vld [vmem:[%s549 + $0x90] sm:$0xff]
      %v823 = vld [vmem:[%s549 + $0x98] sm:$0xff]
      %v824 = vld [vmem:[%s549 + $0xa8] sm:$0xff]
      %v825 = vld [vmem:[%s549 + $0xb0] sm:$0xff]
      %v826 = vlaneseq
      %v827 = vshrl.u32 %v826, 7
      %v828 = vsub.s32 3, %v827
      %v829 = vrot.slane %v649, %v828
      %v830 = vmul.f32 %v810, %v829
      %v831 = vmul.f32 %v811, %v829
      %v832 = vmul.f32 %v812, %v829
      %v833 = vmul.f32 %v813, %v829
      %v834 = vmul.f32 %v814, %v829
      %v835 = vmul.f32 %v815, %v829
      %v836 = vmul.f32 %v816, %v829
      %v837 = vmul.f32 %v817, %v829
      %v838 = vmul.f32 %v818, %v829
      %v839 = vmul.f32 %v819, %v829
      %v840 = vmul.f32 %v820, %v829
      %v841 = vmul.f32 %v821, %v829
      %v842 = vmul.f32 %v822, %v829
      %v843 = vmul.f32 %v823, %v829
      %v844 = vmul.f32 %v824, %v829
      %v845 = vmul.f32 %v825, %v829
      %v846 = vadd.f32 %v794, %v830
      %v847 = vadd.f32 %v795, %v831
      %v848 = vadd.f32 %v796, %v832
      %v849 = vadd.f32 %v797, %v833
      %v850 = vadd.f32 %v798, %v834
      %v851 = vadd.f32 %v799, %v835
      %v852 = vadd.f32 %v800, %v836
      %v853 = vadd.f32 %v801, %v837
      %v854 = vadd.f32 %v802, %v838
      %v855 = vadd.f32 %v803, %v839
      %v856 = vadd.f32 %v804, %v840
      %v857 = vadd.f32 %v805, %v841
      %v858 = vadd.f32 %v806, %v842
      %v859 = vadd.f32 %v807, %v843
      %v860 = vadd.f32 %v808, %v844
      %v861 = vadd.f32 %v809, %v845
      %v862 = vld [vmem:[%s582] sm:$0xff]
      %v863 = vld [vmem:[%s582 + $0x8] sm:$0xff]
      %v864 = vld [vmem:[%s582 + $0x18] sm:$0xff]
      %v865 = vld [vmem:[%s582 + $0x20] sm:$0xff]
      %v866 = vld [vmem:[%s582 + $0x30] sm:$0xff]
      %v867 = vld [vmem:[%s582 + $0x38] sm:$0xff]
      %v868 = vld [vmem:[%s582 + $0x48] sm:$0xff]
      %v869 = vld [vmem:[%s582 + $0x50] sm:$0xff]
      %v870 = vld [vmem:[%s582 + $0x60] sm:$0xff]
      %v871 = vld [vmem:[%s582 + $0x68] sm:$0xff]
      %v872 = vld [vmem:[%s582 + $0x78] sm:$0xff]
      %v873 = vld [vmem:[%s582 + $0x80] sm:$0xff]
      %v874 = vld [vmem:[%s582 + $0x90] sm:$0xff]
      %v875 = vld [vmem:[%s582 + $0x98] sm:$0xff]
      %v876 = vld [vmem:[%s582 + $0xa8] sm:$0xff]
      %v877 = vld [vmem:[%s582 + $0xb0] sm:$0xff]
      %v878 = vlaneseq
      %v879 = vshrl.u32 %v878, 7
      %v880 = vsub.s32 4, %v879
      %v881 = vrot.slane %v649, %v880
      %v882 = vmul.f32 %v862, %v881
      %v883 = vmul.f32 %v863, %v881
      %v884 = vmul.f32 %v864, %v881
      %v885 = vmul.f32 %v865, %v881
      %v886 = vmul.f32 %v866, %v881
      %v887 = vmul.f32 %v867, %v881
      %v888 = vmul.f32 %v868, %v881
      %v889 = vmul.f32 %v869, %v881
      %v890 = vmul.f32 %v870, %v881
      %v891 = vmul.f32 %v871, %v881
      %v892 = vmul.f32 %v872, %v881
      %v893 = vmul.f32 %v873, %v881
      %v894 = vmul.f32 %v874, %v881
      %v895 = vmul.f32 %v875, %v881
      %v896 = vmul.f32 %v876, %v881
      %v897 = vmul.f32 %v877, %v881
      %v898 = vadd.f32 %v846, %v882
      %v899 = vadd.f32 %v847, %v883
      %v900 = vadd.f32 %v848, %v884
      %v901 = vadd.f32 %v849, %v885
      %v902 = vadd.f32 %v850, %v886
      %v903 = vadd.f32 %v851, %v887
      %v904 = vadd.f32 %v852, %v888
      %v905 = vadd.f32 %v853, %v889
      %v906 = vadd.f32 %v854, %v890
      %v907 = vadd.f32 %v855, %v891
      %v908 = vadd.f32 %v856, %v892
      %v909 = vadd.f32 %v857, %v893
      %v910 = vadd.f32 %v858, %v894
      %v911 = vadd.f32 %v859, %v895
      %v912 = vadd.f32 %v860, %v896
      %v913 = vadd.f32 %v861, %v897
      %v914 = vld [vmem:[%s615] sm:$0xff]
      %v915 = vld [vmem:[%s615 + $0x8] sm:$0xff]
      %v916 = vld [vmem:[%s615 + $0x18] sm:$0xff]
      %v917 = vld [vmem:[%s615 + $0x20] sm:$0xff]
      %v918 = vld [vmem:[%s615 + $0x30] sm:$0xff]
      %v919 = vld [vmem:[%s615 + $0x38] sm:$0xff]
      %v920 = vld [vmem:[%s615 + $0x48] sm:$0xff]
      %v921 = vld [vmem:[%s615 + $0x50] sm:$0xff]
      %v922 = vld [vmem:[%s615 + $0x60] sm:$0xff]
      %v923 = vld [vmem:[%s615 + $0x68] sm:$0xff]
      %v924 = vld [vmem:[%s615 + $0x78] sm:$0xff]
      %v925 = vld [vmem:[%s615 + $0x80] sm:$0xff]
      %v926 = vld [vmem:[%s615 + $0x90] sm:$0xff]
      %v927 = vld [vmem:[%s615 + $0x98] sm:$0xff]
      %v928 = vld [vmem:[%s615 + $0xa8] sm:$0xff]
      %v929 = vld [vmem:[%s615 + $0xb0] sm:$0xff]
      %v930 = vlaneseq
      %v931 = vshrl.u32 %v930, 7
      %v932 = vsub.s32 5, %v931
      %v933 = vrot.slane %v649, %v932
      %v934 = vmul.f32 %v914, %v933
      %v935 = vmul.f32 %v915, %v933
      %v936 = vmul.f32 %v916, %v933
      %v937 = vmul.f32 %v917, %v933
      %v938 = vmul.f32 %v918, %v933
      %v939 = vmul.f32 %v919, %v933
      %v940 = vmul.f32 %v920, %v933
      %v941 = vmul.f32 %v921, %v933
      %v942 = vmul.f32 %v922, %v933
      %v943 = vmul.f32 %v923, %v933
      %v944 = vmul.f32 %v924, %v933
      %v945 = vmul.f32 %v925, %v933
      %v946 = vmul.f32 %v926, %v933
      %v947 = vmul.f32 %v927, %v933
      %v948 = vmul.f32 %v928, %v933
      %v949 = vmul.f32 %v929, %v933
      %v950 = vadd.f32 %v898, %v934
      %v951 = vadd.f32 %v899, %v935
      %v952 = vadd.f32 %v900, %v936
      %v953 = vadd.f32 %v901, %v937
      %v954 = vadd.f32 %v902, %v938
      %v955 = vadd.f32 %v903, %v939
      %v956 = vadd.f32 %v904, %v940
      %v957 = vadd.f32 %v905, %v941
      %v958 = vadd.f32 %v906, %v942
      %v959 = vadd.f32 %v907, %v943
      %v960 = vadd.f32 %v908, %v944
      %v961 = vadd.f32 %v909, %v945
      %v962 = vadd.f32 %v910, %v946
      %v963 = vadd.f32 %v911, %v947
      %v964 = vadd.f32 %v912, %v948
      %v965 = vadd.f32 %v913, %v949
      %s966 = scalar_lea.vmem [#allocation2], 96
      %v967 = vld [vmem:[%s966] sm:$0xff]
      %v968 = vld [vmem:[%s966 + $0x8] sm:$0xff]
      %v969 = vld [vmem:[%s966 + $0x18] sm:$0xff]
      %v970 = vld [vmem:[%s966 + $0x20] sm:$0xff]
      %v971 = vld [vmem:[%s966 + $0x30] sm:$0xff]
      %v972 = vld [vmem:[%s966 + $0x38] sm:$0xff]
      %v973 = vld [vmem:[%s966 + $0x48] sm:$0xff]
      %v974 = vld [vmem:[%s966 + $0x50] sm:$0xff]
      %v975 = vld [vmem:[%s966 + $0x60] sm:$0xff]
      %v976 = vld [vmem:[%s966 + $0x68] sm:$0xff]
      %v977 = vld [vmem:[%s966 + $0x78] sm:$0xff]
      %v978 = vld [vmem:[%s966 + $0x80] sm:$0xff]
      %v979 = vld [vmem:[%s966 + $0x90] sm:$0xff]
      %v980 = vld [vmem:[%s966 + $0x98] sm:$0xff]
      %v981 = vld [vmem:[%s966 + $0xa8] sm:$0xff]
      %v982 = vld [vmem:[%s966 + $0xb0] sm:$0xff]
      %v983 = vlaneseq
      %v984 = vshrl.u32 %v983, 7
      %v985 = vsub.s32 6, %v984
      %v986 = vrot.slane %v649, %v985
      %v987 = vmul.f32 %v967, %v986
      %v988 = vmul.f32 %v968, %v986
      %v989 = vmul.f32 %v969, %v986
      %v990 = vmul.f32 %v970, %v986
      %v991 = vmul.f32 %v971, %v986
      %v992 = vmul.f32 %v972, %v986
      %v993 = vmul.f32 %v973, %v986
      %v994 = vmul.f32 %v974, %v986
      %v995 = vmul.f32 %v975, %v986
      %v996 = vmul.f32 %v976, %v986
      %v997 = vmul.f32 %v977, %v986
      %v998 = vmul.f32 %v978, %v986
      %v999 = vmul.f32 %v979, %v986
      %v1000 = vmul.f32 %v980, %v986
      %v1001 = vmul.f32 %v981, %v986
      %v1002 = vmul.f32 %v982, %v986
      %v1003 = vadd.f32 %v950, %v987
      %v1004 = vadd.f32 %v951, %v988
      %v1005 = vadd.f32 %v952, %v989
      %v1006 = vadd.f32 %v953, %v990
      %v1007 = vadd.f32 %v954, %v991
      %v1008 = vadd.f32 %v955, %v992
      %v1009 = vadd.f32 %v956, %v993
      %v1010 = vadd.f32 %v957, %v994
      %v1011 = vadd.f32 %v958, %v995
      %v1012 = vadd.f32 %v959, %v996
      %v1013 = vadd.f32 %v960, %v997
      %v1014 = vadd.f32 %v961, %v998
      %v1015 = vadd.f32 %v962, %v999
      %v1016 = vadd.f32 %v963, %v1000
      %v1017 = vadd.f32 %v964, %v1001
      %v1018 = vadd.f32 %v965, %v1002
      %s1019 = scalar_lea.vmem [#allocation2], 576
      %v1020 = vld [vmem:[%s1019] sm:$0xff]
      %v1021 = vld [vmem:[%s1019 + $0x8] sm:$0xff]
      %v1022 = vld [vmem:[%s1019 + $0x18] sm:$0xff]
      %v1023 = vld [vmem:[%s1019 + $0x20] sm:$0xff]
      %v1024 = vld [vmem:[%s1019 + $0x30] sm:$0xff]
      %v1025 = vld [vmem:[%s1019 + $0x38] sm:$0xff]
      %v1026 = vld [vmem:[%s1019 + $0x48] sm:$0xff]
      %v1027 = vld [vmem:[%s1019 + $0x50] sm:$0xff]
      %v1028 = vld [vmem:[%s1019 + $0x60] sm:$0xff]
      %v1029 = vld [vmem:[%s1019 + $0x68] sm:$0xff]
      %v1030 = vld [vmem:[%s1019 + $0x78] sm:$0xff]
      %v1031 = vld [vmem:[%s1019 + $0x80] sm:$0xff]
      %v1032 = vld [vmem:[%s1019 + $0x90] sm:$0xff]
      %v1033 = vld [vmem:[%s1019 + $0x98] sm:$0xff]
      %v1034 = vld [vmem:[%s1019 + $0xa8] sm:$0xff]
      %v1035 = vld [vmem:[%s1019 + $0xb0] sm:$0xff]
      %v1036 = vlaneseq
      %v1037 = vshrl.u32 %v1036, 7
      %v1038 = vsub.s32 7, %v1037
      %v1039 = vrot.slane %v649, %v1038
      %v1040 = vmul.f32 %v1020, %v1039
      %v1041 = vmul.f32 %v1021, %v1039
      %v1042 = vmul.f32 %v1022, %v1039
      %v1043 = vmul.f32 %v1023, %v1039
      %v1044 = vmul.f32 %v1024, %v1039
      %v1045 = vmul.f32 %v1025, %v1039
      %v1046 = vmul.f32 %v1026, %v1039
      %v1047 = vmul.f32 %v1027, %v1039
      %v1048 = vmul.f32 %v1028, %v1039
      %v1049 = vmul.f32 %v1029, %v1039
      %v1050 = vmul.f32 %v1030, %v1039
      %v1051 = vmul.f32 %v1031, %v1039
      %v1052 = vmul.f32 %v1032, %v1039
      %v1053 = vmul.f32 %v1033, %v1039
      %v1054 = vmul.f32 %v1034, %v1039
      %v1055 = vmul.f32 %v1035, %v1039
      %v1056 = vadd.f32 %v1003, %v1040
      %v1057 = vadd.f32 %v1004, %v1041
      %v1058 = vadd.f32 %v1005, %v1042
      %v1059 = vadd.f32 %v1006, %v1043
      %v1060 = vadd.f32 %v1007, %v1044
      %v1061 = vadd.f32 %v1008, %v1045
      %v1062 = vadd.f32 %v1009, %v1046
      %v1063 = vadd.f32 %v1010, %v1047
      %v1064 = vadd.f32 %v1011, %v1048
      %v1065 = vadd.f32 %v1012, %v1049
      %v1066 = vadd.f32 %v1013, %v1050
      %v1067 = vadd.f32 %v1014, %v1051
      %v1068 = vadd.f32 %v1015, %v1052
      %v1069 = vadd.f32 %v1016, %v1053
      %v1070 = vadd.f32 %v1017, %v1054
      %v1071 = vadd.f32 %v1018, %v1055
      %s1072 = scalar_lea.vmem [#allocation2], 1056
      %v1073 = vld [vmem:[%s1072] sm:$0xff]
      %v1074 = vld [vmem:[%s1072 + $0x8] sm:$0xff]
      %v1075 = vld [vmem:[%s1072 + $0x18] sm:$0xff]
      %v1076 = vld [vmem:[%s1072 + $0x20] sm:$0xff]
      %v1077 = vld [vmem:[%s1072 + $0x30] sm:$0xff]
      %v1078 = vld [vmem:[%s1072 + $0x38] sm:$0xff]
      %v1079 = vld [vmem:[%s1072 + $0x48] sm:$0xff]
      %v1080 = vld [vmem:[%s1072 + $0x50] sm:$0xff]
      %v1081 = vld [vmem:[%s1072 + $0x60] sm:$0xff]
      %v1082 = vld [vmem:[%s1072 + $0x68] sm:$0xff]
      %v1083 = vld [vmem:[%s1072 + $0x78] sm:$0xff]
      %v1084 = vld [vmem:[%s1072 + $0x80] sm:$0xff]
      %v1085 = vld [vmem:[%s1072 + $0x90] sm:$0xff]
      %v1086 = vld [vmem:[%s1072 + $0x98] sm:$0xff]
      %v1087 = vld [vmem:[%s1072 + $0xa8] sm:$0xff]
      %v1088 = vld [vmem:[%s1072 + $0xb0] sm:$0xff]
      %v1089 = vlaneseq
      %v1090 = vshrl.u32 %v1089, 7
      %v1091 = vsub.s32 0, %v1090
      %v1092 = vrot.slane %v650, %v1091
      %v1093 = vmul.f32 %v1073, %v1092
      %v1094 = vmul.f32 %v1074, %v1092
      %v1095 = vmul.f32 %v1075, %v1092
      %v1096 = vmul.f32 %v1076, %v1092
      %v1097 = vmul.f32 %v1077, %v1092
      %v1098 = vmul.f32 %v1078, %v1092
      %v1099 = vmul.f32 %v1079, %v1092
      %v1100 = vmul.f32 %v1080, %v1092
      %v1101 = vmul.f32 %v1081, %v1092
      %v1102 = vmul.f32 %v1082, %v1092
      %v1103 = vmul.f32 %v1083, %v1092
      %v1104 = vmul.f32 %v1084, %v1092
      %v1105 = vmul.f32 %v1085, %v1092
      %v1106 = vmul.f32 %v1086, %v1092
      %v1107 = vmul.f32 %v1087, %v1092
      %v1108 = vmul.f32 %v1088, %v1092
      %v1109 = vadd.f32 %v1056, %v1093
      %v1110 = vadd.f32 %v1057, %v1094
      %v1111 = vadd.f32 %v1058, %v1095
      %v1112 = vadd.f32 %v1059, %v1096
      %v1113 = vadd.f32 %v1060, %v1097
      %v1114 = vadd.f32 %v1061, %v1098
      %v1115 = vadd.f32 %v1062, %v1099
      %v1116 = vadd.f32 %v1063, %v1100
      %v1117 = vadd.f32 %v1064, %v1101
      %v1118 = vadd.f32 %v1065, %v1102
      %v1119 = vadd.f32 %v1066, %v1103
      %v1120 = vadd.f32 %v1067, %v1104
      %v1121 = vadd.f32 %v1068, %v1105
      %v1122 = vadd.f32 %v1069, %v1106
      %v1123 = vadd.f32 %v1070, %v1107
      %v1124 = vadd.f32 %v1071, %v1108
      %v1125 = vpack.c.bf16 %v1110, %v1109
      %v1126 = vpack.c.bf16 %v1112, %v1111
      %v1127 = vpack.c.bf16 %v1114, %v1113
      %v1128 = vpack.c.bf16 %v1116, %v1115
      %v1129 = vpack.c.bf16 %v1118, %v1117
      %v1130 = vpack.c.bf16 %v1120, %v1119
      %v1131 = vpack.c.bf16 %v1122, %v1121
      %v1132 = vpack.c.bf16 %v1124, %v1123
      %v1134 = vsel %vm368, %v1125, 0
      %v1137 = vsel %vm368, %v1126, 0
      %v1140 = vsel %vm368, %v1127, 0
      %v1143 = vsel %vm368, %v1128, 0
      %v1146 = vsel %vm368, %v1129, 0
      %v1149 = vsel %vm368, %v1130, 0
      %v1152 = vsel %vm368, %v1131, 0
      %v1155 = vsel %vm368, %v1132, 0
      %vm1157 = vcmask 1041408
      %v1159 = vsel %vm1157, %v651, 0
      %1161 = vmatprep.subr.bf16.mxu0 0
      %1162 = vmatpush1.bf16.msra.mxu0 0
      %1163 = vmatprep.subr.bf16.mxu0 0
      %1164 = vmatpush1.bf16.msra.mxu0 0
      %1165 = vmatprep.subr.bf16.mxu0 0
      %1166 = vmatpush1.bf16.msra.mxu0 0
      %1167 = vmatprep.subr.bf16.mxu0 0
      %1168 = vmatpush1.bf16.msra.mxu0 0
      %1169 = vmatprep.subr.bf16.mxu0 0
      %1170 = vmatpush1.bf16.msra.mxu0 0
      %1171 = vmatprep.subr.bf16.mxu0 0
      %1172 = vmatpush1.bf16.msra.mxu0 0
      %1173 = vmatprep.subr.bf16.mxu0 0
      %1174 = vmatpush1.bf16.msra.mxu0 0
      %1175 = vmatprep.subr.bf16.mxu0 0
      %1176 = vmatpush1.bf16.msra.mxu0 %v1159
      %1177 = vmatprep.subr.bf16.mxu0 0
      %1178 = vmatpush2.bf16.msra.mxu0 0
      %1179 = vmatprep.subr.bf16.mxu0 0
      %1180 = vmatpush2.bf16.msra.mxu0 0
      %1181 = vmatprep.subr.bf16.mxu0 0
      %1182 = vmatpush2.bf16.msra.mxu0 0
      %1183 = vmatprep.subr.bf16.mxu0 0
      %1184 = vmatpush2.bf16.msra.mxu0 0
      %1185 = vmatprep.subr.bf16.mxu0 0
      %1186 = vmatpush2.bf16.msra.mxu0 0
      %1187 = vmatprep.subr.bf16.mxu0 0
      %1188 = vmatpush2.bf16.msra.mxu0 0
      %1189 = vmatprep.subr.bf16.mxu0 0
      %1190 = vmatpush2.bf16.msra.mxu0 0
      %1191 = vmatprep.subr.bf16.mxu0 0
      %1192 = vmatpush2.bf16.msra.mxu0 0
      %1193 = vmatprep.mubr.bf16.mxu0 0
      %1194 = vmatmul.mubr.bf16.gmra.mxu0 %v1134
      %v1195 = vpop.f32.mrf.mxu0
      %v1196 = vadd.f32 0.0, %v1195
      %v1197 = vpop.f32.mrf.mxu0
      %v1198 = vpop.f32.mrf.mxu0
      %v1199 = vadd.f32 0.0, %v1198
      %v1200 = vpop.f32.mrf.mxu0
      %1201 = vmatprep.mubr.bf16.mxu0 0
      %1202 = vmatmul.mubr.bf16.gmra.mxu0 %v1137
      %v1203 = vpop.f32.mrf.mxu0
      %v1204 = vadd.f32 0.0, %v1203
      %v1205 = vpop.f32.mrf.mxu0
      %v1206 = vpop.f32.mrf.mxu0
      %v1207 = vadd.f32 0.0, %v1206
      %v1208 = vpop.f32.mrf.mxu0
      %1209 = vmatprep.mubr.bf16.mxu0 0
      %1210 = vmatmul.mubr.bf16.gmra.mxu0 %v1140
      %v1211 = vpop.f32.mrf.mxu0
      %v1212 = vadd.f32 0.0, %v1211
      %v1213 = vpop.f32.mrf.mxu0
      %v1214 = vpop.f32.mrf.mxu0
      %v1215 = vadd.f32 0.0, %v1214
      %v1216 = vpop.f32.mrf.mxu0
      %1217 = vmatprep.mubr.bf16.mxu0 0
      %1218 = vmatmul.mubr.bf16.gmra.mxu0 %v1143
      %v1219 = vpop.f32.mrf.mxu0
      %v1220 = vadd.f32 0.0, %v1219
      %v1221 = vpop.f32.mrf.mxu0
      %v1222 = vpop.f32.mrf.mxu0
      %v1223 = vadd.f32 0.0, %v1222
      %v1224 = vpop.f32.mrf.mxu0
      %1225 = vmatprep.mubr.bf16.mxu0 0
      %1226 = vmatmul.mubr.bf16.gmra.mxu0 %v1146
      %v1227 = vpop.f32.mrf.mxu0
      %v1228 = vadd.f32 0.0, %v1227
      %v1229 = vpop.f32.mrf.mxu0
      %v1230 = vpop.f32.mrf.mxu0
      %v1231 = vadd.f32 0.0, %v1230
      %v1232 = vpop.f32.mrf.mxu0
      %1233 = vmatprep.mubr.bf16.mxu0 0
      %1234 = vmatmul.mubr.bf16.gmra.mxu0 %v1149
      %v1235 = vpop.f32.mrf.mxu0
      %v1236 = vadd.f32 0.0, %v1235
      %v1237 = vpop.f32.mrf.mxu0
      %v1238 = vpop.f32.mrf.mxu0
      %v1239 = vadd.f32 0.0, %v1238
      %v1240 = vpop.f32.mrf.mxu0
      %1241 = vmatprep.mubr.bf16.mxu0 0
      %1242 = vmatmul.mubr.bf16.gmra.mxu0 %v1152
      %v1243 = vpop.f32.mrf.mxu0
      %v1244 = vadd.f32 0.0, %v1243
      %v1245 = vpop.f32.mrf.mxu0
      %v1246 = vpop.f32.mrf.mxu0
      %v1247 = vadd.f32 0.0, %v1246
      %v1248 = vpop.f32.mrf.mxu0
      %1249 = vmatprep.mubr.bf16.mxu0 0
      %1250 = vmatmul.mubr.bf16.gmra.mxu0 %v1155
      %v1251 = vpop.f32.mrf.mxu0
      %v1252 = vadd.f32 0.0, %v1251
      %v1253 = vpop.f32.mrf.mxu0
      %v1254 = vpop.f32.mrf.mxu0
      %v1255 = vadd.f32 0.0, %v1254
      %v1256 = vpop.f32.mrf.mxu0
      %1257 = vdwg.mxu0
      %vm1258 = vcmask 64512
      %1259 = vst.msk [vmem:[%s224] sm:$0xff] %vm1258, %v1196
      %1260 = vst.msk [vmem:[%s224 + $0x8] sm:$0xff] %vm1258, %v1199
      %1261 = vst.msk [vmem:[%s224 + $0x10] sm:$0xff] %vm1258, %v1204
      %1262 = vst.msk [vmem:[%s224 + $0x18] sm:$0xff] %vm1258, %v1207
      %1263 = vst.msk [vmem:[%s224 + $0x20] sm:$0xff] %vm1258, %v1212
      %1264 = vst.msk [vmem:[%s224 + $0x28] sm:$0xff] %vm1258, %v1215
      %1265 = vst.msk [vmem:[%s224 + $0x30] sm:$0xff] %vm1258, %v1220
      %1266 = vst.msk [vmem:[%s224 + $0x38] sm:$0xff] %vm1258, %v1223
      %1267 = vst.msk [vmem:[%s224 + $0x40] sm:$0xff] %vm1258, %v1228
      %1268 = vst.msk [vmem:[%s224 + $0x48] sm:$0xff] %vm1258, %v1231
      %1269 = vst.msk [vmem:[%s224 + $0x50] sm:$0xff] %vm1258, %v1236
      %1270 = vst.msk [vmem:[%s224 + $0x58] sm:$0xff] %vm1258, %v1239
      %1271 = vst.msk [vmem:[%s224 + $0x60] sm:$0xff] %vm1258, %v1244
      %1272 = vst.msk [vmem:[%s224 + $0x68] sm:$0xff] %vm1258, %v1247
      %1273 = vst.msk [vmem:[%s224 + $0x70] sm:$0xff] %vm1258, %v1252
      %1274 = vst.msk [vmem:[%s224 + $0x78] sm:$0xff] %vm1258, %v1255
      %s1275 = scalar_lea.vmem [#allocation2], 192
      %v1276 = vld [vmem:[%s1275] sm:$0xff]
      %v1277 = vld [vmem:[%s1275 + $0x8] sm:$0xff]
      %v1278 = vld [vmem:[%s1275 + $0x18] sm:$0xff]
      %v1279 = vld [vmem:[%s1275 + $0x20] sm:$0xff]
      %v1280 = vld [vmem:[%s1275 + $0x30] sm:$0xff]
      %v1281 = vld [vmem:[%s1275 + $0x38] sm:$0xff]
      %v1282 = vld [vmem:[%s1275 + $0x48] sm:$0xff]
      %v1283 = vld [vmem:[%s1275 + $0x50] sm:$0xff]
      %v1284 = vld [vmem:[%s1275 + $0x60] sm:$0xff]
      %v1285 = vld [vmem:[%s1275 + $0x68] sm:$0xff]
      %v1286 = vld [vmem:[%s1275 + $0x78] sm:$0xff]
      %v1287 = vld [vmem:[%s1275 + $0x80] sm:$0xff]
      %v1288 = vld [vmem:[%s1275 + $0x90] sm:$0xff]
      %v1289 = vld [vmem:[%s1275 + $0x98] sm:$0xff]
      %v1290 = vld [vmem:[%s1275 + $0xa8] sm:$0xff]
      %v1291 = vld [vmem:[%s1275 + $0xb0] sm:$0xff]
      %v1292 = vmul.f32 %v1276, %v671
      %v1293 = vmul.f32 %v1277, %v671
      %v1294 = vmul.f32 %v1278, %v671
      %v1295 = vmul.f32 %v1279, %v671
      %v1296 = vmul.f32 %v1280, %v671
      %v1297 = vmul.f32 %v1281, %v671
      %v1298 = vmul.f32 %v1282, %v671
      %v1299 = vmul.f32 %v1283, %v671
      %v1300 = vmul.f32 %v1284, %v671
      %v1301 = vmul.f32 %v1285, %v671
      %v1302 = vmul.f32 %v1286, %v671
      %v1303 = vmul.f32 %v1287, %v671
      %v1304 = vmul.f32 %v1288, %v671
      %v1305 = vmul.f32 %v1289, %v671
      %v1306 = vmul.f32 %v1290, %v671
      %v1307 = vmul.f32 %v1291, %v671
      %v1308 = vadd.f32 %v1292, 0.0
      %v1309 = vadd.f32 %v1293, 0.0
      %v1310 = vadd.f32 %v1294, 0.0
      %v1311 = vadd.f32 %v1295, 0.0
      %v1312 = vadd.f32 %v1296, 0.0
      %v1313 = vadd.f32 %v1297, 0.0
      %v1314 = vadd.f32 %v1298, 0.0
      %v1315 = vadd.f32 %v1299, 0.0
      %v1316 = vadd.f32 %v1300, 0.0
      %v1317 = vadd.f32 %v1301, 0.0
      %v1318 = vadd.f32 %v1302, 0.0
      %v1319 = vadd.f32 %v1303, 0.0
      %v1320 = vadd.f32 %v1304, 0.0
      %v1321 = vadd.f32 %v1305, 0.0
      %v1322 = vadd.f32 %v1306, 0.0
      %v1323 = vadd.f32 %v1307, 0.0
      %s1324 = scalar_lea.vmem [#allocation2], 672
      %v1325 = vld [vmem:[%s1324] sm:$0xff]
      %v1326 = vld [vmem:[%s1324 + $0x8] sm:$0xff]
      %v1327 = vld [vmem:[%s1324 + $0x18] sm:$0xff]
      %v1328 = vld [vmem:[%s1324 + $0x20] sm:$0xff]
      %v1329 = vld [vmem:[%s1324 + $0x30] sm:$0xff]
      %v1330 = vld [vmem:[%s1324 + $0x38] sm:$0xff]
      %v1331 = vld [vmem:[%s1324 + $0x48] sm:$0xff]
      %v1332 = vld [vmem:[%s1324 + $0x50] sm:$0xff]
      %v1333 = vld [vmem:[%s1324 + $0x60] sm:$0xff]
      %v1334 = vld [vmem:[%s1324 + $0x68] sm:$0xff]
      %v1335 = vld [vmem:[%s1324 + $0x78] sm:$0xff]
      %v1336 = vld [vmem:[%s1324 + $0x80] sm:$0xff]
      %v1337 = vld [vmem:[%s1324 + $0x90] sm:$0xff]
      %v1338 = vld [vmem:[%s1324 + $0x98] sm:$0xff]
      %v1339 = vld [vmem:[%s1324 + $0xa8] sm:$0xff]
      %v1340 = vld [vmem:[%s1324 + $0xb0] sm:$0xff]
      %v1341 = vmul.f32 %v1325, %v724
      %v1342 = vmul.f32 %v1326, %v724
      %v1343 = vmul.f32 %v1327, %v724
      %v1344 = vmul.f32 %v1328, %v724
      %v1345 = vmul.f32 %v1329, %v724
      %v1346 = vmul.f32 %v1330, %v724
      %v1347 = vmul.f32 %v1331, %v724
      %v1348 = vmul.f32 %v1332, %v724
      %v1349 = vmul.f32 %v1333, %v724
      %v1350 = vmul.f32 %v1334, %v724
      %v1351 = vmul.f32 %v1335, %v724
      %v1352 = vmul.f32 %v1336, %v724
      %v1353 = vmul.f32 %v1337, %v724
      %v1354 = vmul.f32 %v1338, %v724
      %v1355 = vmul.f32 %v1339, %v724
      %v1356 = vmul.f32 %v1340, %v724
      %v1357 = vadd.f32 %v1308, %v1341
      %v1358 = vadd.f32 %v1309, %v1342
      %v1359 = vadd.f32 %v1310, %v1343
      %v1360 = vadd.f32 %v1311, %v1344
      %v1361 = vadd.f32 %v1312, %v1345
      %v1362 = vadd.f32 %v1313, %v1346
      %v1363 = vadd.f32 %v1314, %v1347
      %v1364 = vadd.f32 %v1315, %v1348
      %v1365 = vadd.f32 %v1316, %v1349
      %v1366 = vadd.f32 %v1317, %v1350
      %v1367 = vadd.f32 %v1318, %v1351
      %v1368 = vadd.f32 %v1319, %v1352
      %v1369 = vadd.f32 %v1320, %v1353
      %v1370 = vadd.f32 %v1321, %v1354
      %v1371 = vadd.f32 %v1322, %v1355
      %v1372 = vadd.f32 %v1323, %v1356
      %s1373 = scalar_lea.vmem [#allocation2], 1152
      %v1374 = vld [vmem:[%s1373] sm:$0xff]
      %v1375 = vld [vmem:[%s1373 + $0x8] sm:$0xff]
      %v1376 = vld [vmem:[%s1373 + $0x18] sm:$0xff]
      %v1377 = vld [vmem:[%s1373 + $0x20] sm:$0xff]
      %v1378 = vld [vmem:[%s1373 + $0x30] sm:$0xff]
      %v1379 = vld [vmem:[%s1373 + $0x38] sm:$0xff]
      %v1380 = vld [vmem:[%s1373 + $0x48] sm:$0xff]
      %v1381 = vld [vmem:[%s1373 + $0x50] sm:$0xff]
      %v1382 = vld [vmem:[%s1373 + $0x60] sm:$0xff]
      %v1383 = vld [vmem:[%s1373 + $0x68] sm:$0xff]
      %v1384 = vld [vmem:[%s1373 + $0x78] sm:$0xff]
      %v1385 = vld [vmem:[%s1373 + $0x80] sm:$0xff]
      %v1386 = vld [vmem:[%s1373 + $0x90] sm:$0xff]
      %v1387 = vld [vmem:[%s1373 + $0x98] sm:$0xff]
      %v1388 = vld [vmem:[%s1373 + $0xa8] sm:$0xff]
      %v1389 = vld [vmem:[%s1373 + $0xb0] sm:$0xff]
      %v1390 = vmul.f32 %v1374, %v777
      %v1391 = vmul.f32 %v1375, %v777
      %v1392 = vmul.f32 %v1376, %v777
      %v1393 = vmul.f32 %v1377, %v777
      %v1394 = vmul.f32 %v1378, %v777
      %v1395 = vmul.f32 %v1379, %v777
      %v1396 = vmul.f32 %v1380, %v777
      %v1397 = vmul.f32 %v1381, %v777
      %v1398 = vmul.f32 %v1382, %v777
      %v1399 = vmul.f32 %v1383, %v777
      %v1400 = vmul.f32 %v1384, %v777
      %v1401 = vmul.f32 %v1385, %v777
      %v1402 = vmul.f32 %v1386, %v777
      %v1403 = vmul.f32 %v1387, %v777
      %v1404 = vmul.f32 %v1388, %v777
      %v1405 = vmul.f32 %v1389, %v777
      %v1406 = vadd.f32 %v1357, %v1390
      %v1407 = vadd.f32 %v1358, %v1391
      %v1408 = vadd.f32 %v1359, %v1392
      %v1409 = vadd.f32 %v1360, %v1393
      %v1410 = vadd.f32 %v1361, %v1394
      %v1411 = vadd.f32 %v1362, %v1395
      %v1412 = vadd.f32 %v1363, %v1396
      %v1413 = vadd.f32 %v1364, %v1397
      %v1414 = vadd.f32 %v1365, %v1398
      %v1415 = vadd.f32 %v1366, %v1399
      %v1416 = vadd.f32 %v1367, %v1400
      %v1417 = vadd.f32 %v1368, %v1401
      %v1418 = vadd.f32 %v1369, %v1402
      %v1419 = vadd.f32 %v1370, %v1403
      %v1420 = vadd.f32 %v1371, %v1404
      %v1421 = vadd.f32 %v1372, %v1405
      %s1422 = scalar_lea.vmem [#allocation2], 240
      %v1423 = vld [vmem:[%s1422] sm:$0xff]
      %v1424 = vld [vmem:[%s1422 + $0x8] sm:$0xff]
      %v1425 = vld [vmem:[%s1422 + $0x18] sm:$0xff]
      %v1426 = vld [vmem:[%s1422 + $0x20] sm:$0xff]
      %v1427 = vld [vmem:[%s1422 + $0x30] sm:$0xff]
      %v1428 = vld [vmem:[%s1422 + $0x38] sm:$0xff]
      %v1429 = vld [vmem:[%s1422 + $0x48] sm:$0xff]
      %v1430 = vld [vmem:[%s1422 + $0x50] sm:$0xff]
      %v1431 = vld [vmem:[%s1422 + $0x60] sm:$0xff]
      %v1432 = vld [vmem:[%s1422 + $0x68] sm:$0xff]
      %v1433 = vld [vmem:[%s1422 + $0x78] sm:$0xff]
      %v1434 = vld [vmem:[%s1422 + $0x80] sm:$0xff]
      %v1435 = vld [vmem:[%s1422 + $0x90] sm:$0xff]
      %v1436 = vld [vmem:[%s1422 + $0x98] sm:$0xff]
      %v1437 = vld [vmem:[%s1422 + $0xa8] sm:$0xff]
      %v1438 = vld [vmem:[%s1422 + $0xb0] sm:$0xff]
      %v1439 = vmul.f32 %v1423, %v829
      %v1440 = vmul.f32 %v1424, %v829
      %v1441 = vmul.f32 %v1425, %v829
      %v1442 = vmul.f32 %v1426, %v829
      %v1443 = vmul.f32 %v1427, %v829
      %v1444 = vmul.f32 %v1428, %v829
      %v1445 = vmul.f32 %v1429, %v829
      %v1446 = vmul.f32 %v1430, %v829
      %v1447 = vmul.f32 %v1431, %v829
      %v1448 = vmul.f32 %v1432, %v829
      %v1449 = vmul.f32 %v1433, %v829
      %v1450 = vmul.f32 %v1434, %v829
      %v1451 = vmul.f32 %v1435, %v829
      %v1452 = vmul.f32 %v1436, %v829
      %v1453 = vmul.f32 %v1437, %v829
      %v1454 = vmul.f32 %v1438, %v829
      %v1455 = vadd.f32 %v1406, %v1439
      %v1456 = vadd.f32 %v1407, %v1440
      %v1457 = vadd.f32 %v1408, %v1441
      %v1458 = vadd.f32 %v1409, %v1442
      %v1459 = vadd.f32 %v1410, %v1443
      %v1460 = vadd.f32 %v1411, %v1444
      %v1461 = vadd.f32 %v1412, %v1445
      %v1462 = vadd.f32 %v1413, %v1446
      %v1463 = vadd.f32 %v1414, %v1447
      %v1464 = vadd.f32 %v1415, %v1448
      %v1465 = vadd.f32 %v1416, %v1449
      %v1466 = vadd.f32 %v1417, %v1450
      %v1467 = vadd.f32 %v1418, %v1451
      %v1468 = vadd.f32 %v1419, %v1452
      %v1469 = vadd.f32 %v1420, %v1453
      %v1470 = vadd.f32 %v1421, %v1454
      %s1471 = scalar_lea.vmem [#allocation2], 720
      %v1472 = vld [vmem:[%s1471] sm:$0xff]
      %v1473 = vld [vmem:[%s1471 + $0x8] sm:$0xff]
      %v1474 = vld [vmem:[%s1471 + $0x18] sm:$0xff]
      %v1475 = vld [vmem:[%s1471 + $0x20] sm:$0xff]
      %v1476 = vld [vmem:[%s1471 + $0x30] sm:$0xff]
      %v1477 = vld [vmem:[%s1471 + $0x38] sm:$0xff]
      %v1478 = vld [vmem:[%s1471 + $0x48] sm:$0xff]
      %v1479 = vld [vmem:[%s1471 + $0x50] sm:$0xff]
      %v1480 = vld [vmem:[%s1471 + $0x60] sm:$0xff]
      %v1481 = vld [vmem:[%s1471 + $0x68] sm:$0xff]
      %v1482 = vld [vmem:[%s1471 + $0x78] sm:$0xff]
      %v1483 = vld [vmem:[%s1471 + $0x80] sm:$0xff]
      %v1484 = vld [vmem:[%s1471 + $0x90] sm:$0xff]
      %v1485 = vld [vmem:[%s1471 + $0x98] sm:$0xff]
      %v1486 = vld [vmem:[%s1471 + $0xa8] sm:$0xff]
      %v1487 = vld [vmem:[%s1471 + $0xb0] sm:$0xff]
      %v1488 = vmul.f32 %v1472, %v881
      %v1489 = vmul.f32 %v1473, %v881
      %v1490 = vmul.f32 %v1474, %v881
      %v1491 = vmul.f32 %v1475, %v881
      %v1492 = vmul.f32 %v1476, %v881
      %v1493 = vmul.f32 %v1477, %v881
      %v1494 = vmul.f32 %v1478, %v881
      %v1495 = vmul.f32 %v1479, %v881
      %v1496 = vmul.f32 %v1480, %v881
      %v1497 = vmul.f32 %v1481, %v881
      %v1498 = vmul.f32 %v1482, %v881
      %v1499 = vmul.f32 %v1483, %v881
      %v1500 = vmul.f32 %v1484, %v881
      %v1501 = vmul.f32 %v1485, %v881
      %v1502 = vmul.f32 %v1486, %v881
      %v1503 = vmul.f32 %v1487, %v881
      %v1504 = vadd.f32 %v1455, %v1488
      %v1505 = vadd.f32 %v1456, %v1489
      %v1506 = vadd.f32 %v1457, %v1490
      %v1507 = vadd.f32 %v1458, %v1491
      %v1508 = vadd.f32 %v1459, %v1492
      %v1509 = vadd.f32 %v1460, %v1493
      %v1510 = vadd.f32 %v1461, %v1494
      %v1511 = vadd.f32 %v1462, %v1495
      %v1512 = vadd.f32 %v1463, %v1496
      %v1513 = vadd.f32 %v1464, %v1497
      %v1514 = vadd.f32 %v1465, %v1498
      %v1515 = vadd.f32 %v1466, %v1499
      %v1516 = vadd.f32 %v1467, %v1500
      %v1517 = vadd.f32 %v1468, %v1501
      %v1518 = vadd.f32 %v1469, %v1502
      %v1519 = vadd.f32 %v1470, %v1503
      %s1520 = scalar_lea.vmem [#allocation2], 1200
      %v1521 = vld [vmem:[%s1520] sm:$0xff]
      %v1522 = vld [vmem:[%s1520 + $0x8] sm:$0xff]
      %v1523 = vld [vmem:[%s1520 + $0x18] sm:$0xff]
      %v1524 = vld [vmem:[%s1520 + $0x20] sm:$0xff]
      %v1525 = vld [vmem:[%s1520 + $0x30] sm:$0xff]
      %v1526 = vld [vmem:[%s1520 + $0x38] sm:$0xff]
      %v1527 = vld [vmem:[%s1520 + $0x48] sm:$0xff]
      %v1528 = vld [vmem:[%s1520 + $0x50] sm:$0xff]
      %v1529 = vld [vmem:[%s1520 + $0x60] sm:$0xff]
      %v1530 = vld [vmem:[%s1520 + $0x68] sm:$0xff]
      %v1531 = vld [vmem:[%s1520 + $0x78] sm:$0xff]
      %v1532 = vld [vmem:[%s1520 + $0x80] sm:$0xff]
      %v1533 = vld [vmem:[%s1520 + $0x90] sm:$0xff]
      %v1534 = vld [vmem:[%s1520 + $0x98] sm:$0xff]
      %v1535 = vld [vmem:[%s1520 + $0xa8] sm:$0xff]
      %v1536 = vld [vmem:[%s1520 + $0xb0] sm:$0xff]
      %v1537 = vmul.f32 %v1521, %v933
      %v1538 = vmul.f32 %v1522, %v933
      %v1539 = vmul.f32 %v1523, %v933
      %v1540 = vmul.f32 %v1524, %v933
      %v1541 = vmul.f32 %v1525, %v933
      %v1542 = vmul.f32 %v1526, %v933
      %v1543 = vmul.f32 %v1527, %v933
      %v1544 = vmul.f32 %v1528, %v933
      %v1545 = vmul.f32 %v1529, %v933
      %v1546 = vmul.f32 %v1530, %v933
      %v1547 = vmul.f32 %v1531, %v933
      %v1548 = vmul.f32 %v1532, %v933
      %v1549 = vmul.f32 %v1533, %v933
      %v1550 = vmul.f32 %v1534, %v933
      %v1551 = vmul.f32 %v1535, %v933
      %v1552 = vmul.f32 %v1536, %v933
      %v1553 = vadd.f32 %v1504, %v1537
      %v1554 = vadd.f32 %v1505, %v1538
      %v1555 = vadd.f32 %v1506, %v1539
      %v1556 = vadd.f32 %v1507, %v1540
      %v1557 = vadd.f32 %v1508, %v1541
      %v1558 = vadd.f32 %v1509, %v1542
      %v1559 = vadd.f32 %v1510, %v1543
      %v1560 = vadd.f32 %v1511, %v1544
      %v1561 = vadd.f32 %v1512, %v1545
      %v1562 = vadd.f32 %v1513, %v1546
      %v1563 = vadd.f32 %v1514, %v1547
      %v1564 = vadd.f32 %v1515, %v1548
      %v1565 = vadd.f32 %v1516, %v1549
      %v1566 = vadd.f32 %v1517, %v1550
      %v1567 = vadd.f32 %v1518, %v1551
      %v1568 = vadd.f32 %v1519, %v1552
      %s1569 = scalar_lea.vmem [#allocation2], 288
      %v1570 = vld [vmem:[%s1569] sm:$0xff]
      %v1571 = vld [vmem:[%s1569 + $0x8] sm:$0xff]
      %v1572 = vld [vmem:[%s1569 + $0x18] sm:$0xff]
      %v1573 = vld [vmem:[%s1569 + $0x20] sm:$0xff]
      %v1574 = vld [vmem:[%s1569 + $0x30] sm:$0xff]
      %v1575 = vld [vmem:[%s1569 + $0x38] sm:$0xff]
      %v1576 = vld [vmem:[%s1569 + $0x48] sm:$0xff]
      %v1577 = vld [vmem:[%s1569 + $0x50] sm:$0xff]
      %v1578 = vld [vmem:[%s1569 + $0x60] sm:$0xff]
      %v1579 = vld [vmem:[%s1569 + $0x68] sm:$0xff]
      %v1580 = vld [vmem:[%s1569 + $0x78] sm:$0xff]
      %v1581 = vld [vmem:[%s1569 + $0x80] sm:$0xff]
      %v1582 = vld [vmem:[%s1569 + $0x90] sm:$0xff]
      %v1583 = vld [vmem:[%s1569 + $0x98] sm:$0xff]
      %v1584 = vld [vmem:[%s1569 + $0xa8] sm:$0xff]
      %v1585 = vld [vmem:[%s1569 + $0xb0] sm:$0xff]
      %v1586 = vmul.f32 %v1570, %v986
      %v1587 = vmul.f32 %v1571, %v986
      %v1588 = vmul.f32 %v1572, %v986
      %v1589 = vmul.f32 %v1573, %v986
      %v1590 = vmul.f32 %v1574, %v986
      %v1591 = vmul.f32 %v1575, %v986
      %v1592 = vmul.f32 %v1576, %v986
      %v1593 = vmul.f32 %v1577, %v986
      %v1594 = vmul.f32 %v1578, %v986
      %v1595 = vmul.f32 %v1579, %v986
      %v1596 = vmul.f32 %v1580, %v986
      %v1597 = vmul.f32 %v1581, %v986
      %v1598 = vmul.f32 %v1582, %v986
      %v1599 = vmul.f32 %v1583, %v986
      %v1600 = vmul.f32 %v1584, %v986
      %v1601 = vmul.f32 %v1585, %v986
      %v1602 = vadd.f32 %v1553, %v1586
      %v1603 = vadd.f32 %v1554, %v1587
      %v1604 = vadd.f32 %v1555, %v1588
      %v1605 = vadd.f32 %v1556, %v1589
      %v1606 = vadd.f32 %v1557, %v1590
      %v1607 = vadd.f32 %v1558, %v1591
      %v1608 = vadd.f32 %v1559, %v1592
      %v1609 = vadd.f32 %v1560, %v1593
      %v1610 = vadd.f32 %v1561, %v1594
      %v1611 = vadd.f32 %v1562, %v1595
      %v1612 = vadd.f32 %v1563, %v1596
      %v1613 = vadd.f32 %v1564, %v1597
      %v1614 = vadd.f32 %v1565, %v1598
      %v1615 = vadd.f32 %v1566, %v1599
      %v1616 = vadd.f32 %v1567, %v1600
      %v1617 = vadd.f32 %v1568, %v1601
      %s1618 = scalar_lea.vmem [#allocation2], 768
      %v1619 = vld [vmem:[%s1618] sm:$0xff]
      %v1620 = vld [vmem:[%s1618 + $0x8] sm:$0xff]
      %v1621 = vld [vmem:[%s1618 + $0x18] sm:$0xff]
      %v1622 = vld [vmem:[%s1618 + $0x20] sm:$0xff]
      %v1623 = vld [vmem:[%s1618 + $0x30] sm:$0xff]
      %v1624 = vld [vmem:[%s1618 + $0x38] sm:$0xff]
      %v1625 = vld [vmem:[%s1618 + $0x48] sm:$0xff]
      %v1626 = vld [vmem:[%s1618 + $0x50] sm:$0xff]
      %v1627 = vld [vmem:[%s1618 + $0x60] sm:$0xff]
      %v1628 = vld [vmem:[%s1618 + $0x68] sm:$0xff]
      %v1629 = vld [vmem:[%s1618 + $0x78] sm:$0xff]
      %v1630 = vld [vmem:[%s1618 + $0x80] sm:$0xff]
      %v1631 = vld [vmem:[%s1618 + $0x90] sm:$0xff]
      %v1632 = vld [vmem:[%s1618 + $0x98] sm:$0xff]
      %v1633 = vld [vmem:[%s1618 + $0xa8] sm:$0xff]
      %v1634 = vld [vmem:[%s1618 + $0xb0] sm:$0xff]
      %v1635 = vmul.f32 %v1619, %v1039
      %v1636 = vmul.f32 %v1620, %v1039
      %v1637 = vmul.f32 %v1621, %v1039
      %v1638 = vmul.f32 %v1622, %v1039
      %v1639 = vmul.f32 %v1623, %v1039
      %v1640 = vmul.f32 %v1624, %v1039
      %v1641 = vmul.f32 %v1625, %v1039
      %v1642 = vmul.f32 %v1626, %v1039
      %v1643 = vmul.f32 %v1627, %v1039
      %v1644 = vmul.f32 %v1628, %v1039
      %v1645 = vmul.f32 %v1629, %v1039
      %v1646 = vmul.f32 %v1630, %v1039
      %v1647 = vmul.f32 %v1631, %v1039
      %v1648 = vmul.f32 %v1632, %v1039
      %v1649 = vmul.f32 %v1633, %v1039
      %v1650 = vmul.f32 %v1634, %v1039
      %v1651 = vadd.f32 %v1602, %v1635
      %v1652 = vadd.f32 %v1603, %v1636
      %v1653 = vadd.f32 %v1604, %v1637
      %v1654 = vadd.f32 %v1605, %v1638
      %v1655 = vadd.f32 %v1606, %v1639
      %v1656 = vadd.f32 %v1607, %v1640
      %v1657 = vadd.f32 %v1608, %v1641
      %v1658 = vadd.f32 %v1609, %v1642
      %v1659 = vadd.f32 %v1610, %v1643
      %v1660 = vadd.f32 %v1611, %v1644
      %v1661 = vadd.f32 %v1612, %v1645
      %v1662 = vadd.f32 %v1613, %v1646
      %v1663 = vadd.f32 %v1614, %v1647
      %v1664 = vadd.f32 %v1615, %v1648
      %v1665 = vadd.f32 %v1616, %v1649
      %v1666 = vadd.f32 %v1617, %v1650
      %s1667 = scalar_lea.vmem [#allocation2], 1248
      %v1668 = vld [vmem:[%s1667] sm:$0xff]
      %v1669 = vld [vmem:[%s1667 + $0x8] sm:$0xff]
      %v1670 = vld [vmem:[%s1667 + $0x18] sm:$0xff]
      %v1671 = vld [vmem:[%s1667 + $0x20] sm:$0xff]
      %v1672 = vld [vmem:[%s1667 + $0x30] sm:$0xff]
      %v1673 = vld [vmem:[%s1667 + $0x38] sm:$0xff]
      %v1674 = vld [vmem:[%s1667 + $0x48] sm:$0xff]
      %v1675 = vld [vmem:[%s1667 + $0x50] sm:$0xff]
      %v1676 = vld [vmem:[%s1667 + $0x60] sm:$0xff]
      %v1677 = vld [vmem:[%s1667 + $0x68] sm:$0xff]
      %v1678 = vld [vmem:[%s1667 + $0x78] sm:$0xff]
      %v1679 = vld [vmem:[%s1667 + $0x80] sm:$0xff]
      %v1680 = vld [vmem:[%s1667 + $0x90] sm:$0xff]
      %v1681 = vld [vmem:[%s1667 + $0x98] sm:$0xff]
      %v1682 = vld [vmem:[%s1667 + $0xa8] sm:$0xff]
      %v1683 = vld [vmem:[%s1667 + $0xb0] sm:$0xff]
      %v1684 = vmul.f32 %v1668, %v1092
      %v1685 = vmul.f32 %v1669, %v1092
      %v1686 = vmul.f32 %v1670, %v1092
      %v1687 = vmul.f32 %v1671, %v1092
      %v1688 = vmul.f32 %v1672, %v1092
      %v1689 = vmul.f32 %v1673, %v1092
      %v1690 = vmul.f32 %v1674, %v1092
      %v1691 = vmul.f32 %v1675, %v1092
      %v1692 = vmul.f32 %v1676, %v1092
      %v1693 = vmul.f32 %v1677, %v1092
      %v1694 = vmul.f32 %v1678, %v1092
      %v1695 = vmul.f32 %v1679, %v1092
      %v1696 = vmul.f32 %v1680, %v1092
      %v1697 = vmul.f32 %v1681, %v1092
      %v1698 = vmul.f32 %v1682, %v1092
      %v1699 = vmul.f32 %v1683, %v1092
      %v1700 = vadd.f32 %v1651, %v1684
      %v1701 = vadd.f32 %v1652, %v1685
      %v1702 = vadd.f32 %v1653, %v1686
      %v1703 = vadd.f32 %v1654, %v1687
      %v1704 = vadd.f32 %v1655, %v1688
      %v1705 = vadd.f32 %v1656, %v1689
      %v1706 = vadd.f32 %v1657, %v1690
      %v1707 = vadd.f32 %v1658, %v1691
      %v1708 = vadd.f32 %v1659, %v1692
      %v1709 = vadd.f32 %v1660, %v1693
      %v1710 = vadd.f32 %v1661, %v1694
      %v1711 = vadd.f32 %v1662, %v1695
      %v1712 = vadd.f32 %v1663, %v1696
      %v1713 = vadd.f32 %v1664, %v1697
      %v1714 = vadd.f32 %v1665, %v1698
      %v1715 = vadd.f32 %v1666, %v1699
      %v1716 = vpack.c.bf16 %v1701, %v1700
      %v1717 = vpack.c.bf16 %v1703, %v1702
      %v1718 = vpack.c.bf16 %v1705, %v1704
      %v1719 = vpack.c.bf16 %v1707, %v1706
      %v1720 = vpack.c.bf16 %v1709, %v1708
      %v1721 = vpack.c.bf16 %v1711, %v1710
      %v1722 = vpack.c.bf16 %v1713, %v1712
      %v1723 = vpack.c.bf16 %v1715, %v1714
      %v1725 = vsel %vm368, %v1716, 0
      %v1728 = vsel %vm368, %v1717, 0
      %v1731 = vsel %vm368, %v1718, 0
      %v1734 = vsel %vm368, %v1719, 0
      %v1737 = vsel %vm368, %v1720, 0
      %v1740 = vsel %vm368, %v1721, 0
      %v1743 = vsel %vm368, %v1722, 0
      %v1746 = vsel %vm368, %v1723, 0
      %1748 = vmatprep.subr.bf16.mxu0 0
      %1749 = vmatpush1.bf16.msra.mxu0 0
      %1750 = vmatprep.subr.bf16.mxu0 0
      %1751 = vmatpush1.bf16.msra.mxu0 0
      %1752 = vmatprep.subr.bf16.mxu0 0
      %1753 = vmatpush1.bf16.msra.mxu0 0
      %1754 = vmatprep.subr.bf16.mxu0 0
      %1755 = vmatpush1.bf16.msra.mxu0 0
      %1756 = vmatprep.subr.bf16.mxu0 0
      %1757 = vmatpush1.bf16.msra.mxu0 0
      %1758 = vmatprep.subr.bf16.mxu0 0
      %1759 = vmatpush1.bf16.msra.mxu0 0
      %1760 = vmatprep.subr.bf16.mxu0 0
      %1761 = vmatpush1.bf16.msra.mxu0 0
      %1762 = vmatprep.subr.bf16.mxu0 0
      %1763 = vmatpush1.bf16.msra.mxu0 %v1159
      %1764 = vmatprep.subr.bf16.mxu0 0
      %1765 = vmatpush2.bf16.msra.mxu0 0
      %1766 = vmatprep.subr.bf16.mxu0 0
      %1767 = vmatpush2.bf16.msra.mxu0 0
      %1768 = vmatprep.subr.bf16.mxu0 0
      %1769 = vmatpush2.bf16.msra.mxu0 0
      %1770 = vmatprep.subr.bf16.mxu0 0
      %1771 = vmatpush2.bf16.msra.mxu0 0
      %1772 = vmatprep.subr.bf16.mxu0 0
      %1773 = vmatpush2.bf16.msra.mxu0 0
      %1774 = vmatprep.subr.bf16.mxu0 0
      %1775 = vmatpush2.bf16.msra.mxu0 0
      %1776 = vmatprep.subr.bf16.mxu0 0
      %1777 = vmatpush2.bf16.msra.mxu0 0
      %1778 = vmatprep.subr.bf16.mxu0 0
      %1779 = vmatpush2.bf16.msra.mxu0 0
      %1780 = vmatprep.mubr.bf16.mxu0 0
      %1781 = vmatmul.mubr.bf16.gmra.mxu0 %v1725
      %v1782 = vpop.f32.mrf.mxu0
      %v1783 = vadd.f32 0.0, %v1782
      %v1784 = vpop.f32.mrf.mxu0
      %v1785 = vpop.f32.mrf.mxu0
      %v1786 = vadd.f32 0.0, %v1785
      %v1787 = vpop.f32.mrf.mxu0
      %1788 = vmatprep.mubr.bf16.mxu0 0
      %1789 = vmatmul.mubr.bf16.gmra.mxu0 %v1728
      %v1790 = vpop.f32.mrf.mxu0
      %v1791 = vadd.f32 0.0, %v1790
      %v1792 = vpop.f32.mrf.mxu0
      %v1793 = vpop.f32.mrf.mxu0
      %v1794 = vadd.f32 0.0, %v1793
      %v1795 = vpop.f32.mrf.mxu0
      %1796 = vmatprep.mubr.bf16.mxu0 0
      %1797 = vmatmul.mubr.bf16.gmra.mxu0 %v1731
      %v1798 = vpop.f32.mrf.mxu0
      %v1799 = vadd.f32 0.0, %v1798
      %v1800 = vpop.f32.mrf.mxu0
      %v1801 = vpop.f32.mrf.mxu0
      %v1802 = vadd.f32 0.0, %v1801
      %v1803 = vpop.f32.mrf.mxu0
      %1804 = vmatprep.mubr.bf16.mxu0 0
      %1805 = vmatmul.mubr.bf16.gmra.mxu0 %v1734
      %v1806 = vpop.f32.mrf.mxu0
      %v1807 = vadd.f32 0.0, %v1806
      %v1808 = vpop.f32.mrf.mxu0
      %v1809 = vpop.f32.mrf.mxu0
      %v1810 = vadd.f32 0.0, %v1809
      %v1811 = vpop.f32.mrf.mxu0
      %1812 = vmatprep.mubr.bf16.mxu0 0
      %1813 = vmatmul.mubr.bf16.gmra.mxu0 %v1737
      %v1814 = vpop.f32.mrf.mxu0
      %v1815 = vadd.f32 0.0, %v1814
      %v1816 = vpop.f32.mrf.mxu0
      %v1817 = vpop.f32.mrf.mxu0
      %v1818 = vadd.f32 0.0, %v1817
      %v1819 = vpop.f32.mrf.mxu0
      %1820 = vmatprep.mubr.bf16.mxu0 0
      %1821 = vmatmul.mubr.bf16.gmra.mxu0 %v1740
      %v1822 = vpop.f32.mrf.mxu0
      %v1823 = vadd.f32 0.0, %v1822
      %v1824 = vpop.f32.mrf.mxu0
      %v1825 = vpop.f32.mrf.mxu0
      %v1826 = vadd.f32 0.0, %v1825
      %v1827 = vpop.f32.mrf.mxu0
      %1828 = vmatprep.mubr.bf16.mxu0 0
      %1829 = vmatmul.mubr.bf16.gmra.mxu0 %v1743
      %v1830 = vpop.f32.mrf.mxu0
      %v1831 = vadd.f32 0.0, %v1830
      %v1832 = vpop.f32.mrf.mxu0
      %v1833 = vpop.f32.mrf.mxu0
      %v1834 = vadd.f32 0.0, %v1833
      %v1835 = vpop.f32.mrf.mxu0
      %1836 = vmatprep.mubr.bf16.mxu0 0
      %1837 = vmatmul.mubr.bf16.gmra.mxu0 %v1746
      %v1838 = vpop.f32.mrf.mxu0
      %v1839 = vadd.f32 0.0, %v1838
      %v1840 = vpop.f32.mrf.mxu0
      %v1841 = vpop.f32.mrf.mxu0
      %v1842 = vadd.f32 0.0, %v1841
      %v1843 = vpop.f32.mrf.mxu0
      %1844 = vdwg.mxu0
      %s1845 = scalar_lea.vmem %s224, 128
      %1846 = vst.msk [vmem:[%s1845] sm:$0xff] %vm1258, %v1783
      %1847 = vst.msk [vmem:[%s1845 + $0x8] sm:$0xff] %vm1258, %v1786
      %1848 = vst.msk [vmem:[%s1845 + $0x10] sm:$0xff] %vm1258, %v1791
      %1849 = vst.msk [vmem:[%s1845 + $0x18] sm:$0xff] %vm1258, %v1794
      %1850 = vst.msk [vmem:[%s1845 + $0x20] sm:$0xff] %vm1258, %v1799
      %1851 = vst.msk [vmem:[%s1845 + $0x28] sm:$0xff] %vm1258, %v1802
      %1852 = vst.msk [vmem:[%s1845 + $0x30] sm:$0xff] %vm1258, %v1807
      %1853 = vst.msk [vmem:[%s1845 + $0x38] sm:$0xff] %vm1258, %v1810
      %1854 = vst.msk [vmem:[%s1845 + $0x40] sm:$0xff] %vm1258, %v1815
      %1855 = vst.msk [vmem:[%s1845 + $0x48] sm:$0xff] %vm1258, %v1818
      %1856 = vst.msk [vmem:[%s1845 + $0x50] sm:$0xff] %vm1258, %v1823
      %1857 = vst.msk [vmem:[%s1845 + $0x58] sm:$0xff] %vm1258, %v1826
      %1858 = vst.msk [vmem:[%s1845 + $0x60] sm:$0xff] %vm1258, %v1831
      %1859 = vst.msk [vmem:[%s1845 + $0x68] sm:$0xff] %vm1258, %v1834
      %1860 = vst.msk [vmem:[%s1845 + $0x70] sm:$0xff] %vm1258, %v1839
      %1861 = vst.msk [vmem:[%s1845 + $0x78] sm:$0xff] %vm1258, %v1842
      %p1862 = scmp.lt.s32.totalorder %s16, 1
      %s1863 = scalar_select %p1862, %s16, 1
      %s1864 = smul.addr %s1863, 32
      %s1865 = smul.addr %s1864, 8
      %s1866 = scalar_lea.vmem %s5, %s1865
      // Predicated region
      $region41: #{tpu_custom_call.1} parent=39 // pred_check
        %p1867 = pneg %p144
      $region42: #{tpu_custom_call.1} parent=39 // pred_check_branch
        %1869 = sbr.rel (%p1867) target = $region44
      $region43: #{tpu_custom_call.1} parent=39 // pred_region
        _
      $region44: #{tpu_custom_call.1} parent=39 // pred_fallthru
        _
    $region40: #{tpu_custom_call.1} parent=5 // pred_fallthru
      _
    %p1870 = scmp.le.s32.totalorder 2, %s11
    // Predicated region
    $region45: #{tpu_custom_call.1} parent=5 // pred_check
      %p1871 = pneg %p1870
    $region46: #{tpu_custom_call.1} parent=5 // pred_check_branch
      %1873 = sbr.rel (%p1871) target = $region48
    $region47: #{tpu_custom_call.1} parent=5 // pred_region
      %s1874 = ssub.s32 %s11, 2
      // Predicated region
      $region49: #{tpu_custom_call.1} parent=47 // pred_check
        %p1875 = pneg %p150
      $region50: #{tpu_custom_call.1} parent=47 // pred_check_branch
        %1877 = sbr.rel (%p1875) target = $region52
      $region51: #{tpu_custom_call.1} parent=47 // pred_region
        %p1878 = scmp.lt.s32.totalorder %s17, 1
        %s1879 = scalar_select %p1878, %s17, 1
        %s1880 = smul.addr %s1879, 32
        %s1881 = smul.addr %s1880, 8
        %s1882 = scalar_lea.vmem %s5, %s1881
      $region52: #{tpu_custom_call.1} parent=47 // pred_fallthru
        _
    $region48: #{tpu_custom_call.1} parent=5 // pred_fallthru
      _
  $region6: #{tpu_custom_call.1} parent=0 // loop_footer
    %s15 = sadd.s32 1, %s11
  $region7: #{tpu_custom_call.1} parent=0 // loop_footer_branch
    %10 = sbr.rel target = $region3
  $region8: #{tpu_custom_call.1} parent=0 // loop_exit
    _

</llo_original>
